<compile_context>
chip_gen: v6e
topology: v6e:2x2x1
jax: 0.10.0
libtpu: 0.0.40
codegen_flags: <defaults>
</compile_context>

<pallas_src>
import functools

import jax
import jax.numpy as jnp
from jax.experimental import pallas as pl
from jax.experimental.pallas import tpu as pltpu


def _round_up(v, m):
    return (v + m - 1) // m * m


# --------------------------------------------------------------------------- #
# Batched matmul + bias kernel (used for the input projection and the fc head) #
# --------------------------------------------------------------------------- #
def _matmul_bias_kernel(x_ref, w_ref, b_ref, o_ref):
    o_ref[...] = (
        jnp.dot(x_ref[...], w_ref[...], preferred_element_type=jnp.float32)
        + b_ref[...]
    ).astype(o_ref.dtype)


def _matmul_bias(x, w, b, *, tm):
    """y = x @ w + b, tiled over rows.  x:(M,K)  w:(K,N)  b:(1,N)  ->  (M,N)."""
    M, K = x.shape
    N = w.shape[1]
    tm = min(tm, M)
    assert M % tm == 0
    return pl.pallas_call(
        _matmul_bias_kernel,
        out_shape=jax.ShapeDtypeStruct((M, N), jnp.float32),
        grid_spec=pltpu.PrefetchScalarGridSpec(
            num_scalar_prefetch=0,
            grid=(M // tm,),
            in_specs=[
                pl.BlockSpec((tm, K), lambda i: (i, 0)),
                pl.BlockSpec((K, N), lambda i: (0, 0)),
                pl.BlockSpec((1, N), lambda i: (0, 0)),
            ],
            out_specs=pl.BlockSpec((tm, N), lambda i: (i, 0)),
        ),
        compiler_params=pltpu.CompilerParams(dimension_semantics=("parallel",)),
    )(x, w, b)


# --------------------------------------------------------------------------- #
# LSTM recurrence kernel (time-chunked; h/c state carried in resident outputs) #
# --------------------------------------------------------------------------- #
def _lstm_recurrence_kernel(gx_ref, whh_t_ref, h0_ref, c0_ref,
                            hist_ref, hn_ref, cn_ref,
                            *, seq_len, t_block, needs_mask):
    t = pl.program_id(0)
    Hp = whh_t_ref.shape[0]

    # hn/cn output blocks have a constant index_map -> VMEM-resident across the
    # whole grid; they double as the persistent h/c state.
    @pl.when(t == 0)
    def _():
        hn_ref[...] = h0_ref[...]
        cn_ref[...] = c0_ref[...]

    whh_t = whh_t_ref[...]          # (Hp, 4*Hp), loaded once per time chunk
    base = t * t_block

    def step(s, carry):
        h, c = carry
        # gx already contains x_t @ W_ih^T + b_ih + b_hh (hoisted big matmul)
        gates = gx_ref[s] + jnp.dot(h, whh_t, preferred_element_type=jnp.float32)
        # PyTorch gate order [i, f, g, o]; each slice is 128-lane aligned (Hp=128k)
        i_g = jax.nn.sigmoid(gates[:, 0 * Hp:1 * Hp])
        f_g = jax.nn.sigmoid(gates[:, 1 * Hp:2 * Hp])
        g_g = jnp.tanh(gates[:, 2 * Hp:3 * Hp])
        o_g = jax.nn.sigmoid(gates[:, 3 * Hp:4 * Hp])
        c_new = f_g * c + i_g * g_g
        h_new = o_g * jnp.tanh(c_new)
        if needs_mask:
            # only taken when S was padded up to a multiple of t_block
            m = ((base + s) < seq_len).astype(jnp.float32)
            h_new = m * h_new + (1.0 - m) * h
            c_new = m * c_new + (1.0 - m) * c
        hist_ref[s] = h_new
        return h_new, c_new

    h_f, c_f = jax.lax.fori_loop(
        0, t_block, step, (hn_ref[...], cn_ref[...]),
        unroll=True if t_block <= 16 else 8)

    hn_ref[...] = h_f
    cn_ref[...] = c_f


# --------------------------------------------------------------------------- #
# Wrapper                                                                      #
# --------------------------------------------------------------------------- #
def lyrics_midi_lstm_forward(x, params, hidden=None, *, t_block=128):
    """x: (batch, seq, input_dim + midi_feature_dim) float32.

    Returns (predictions (batch, seq, output_dim), (h_n, c_n)) with h_n, c_n of
    shape (1, batch, hidden_dim), matching nn.LSTM(num_layers=1, batch_first=True).
    """
    w_ih, w_hh = params["w_ih"], params["w_hh"]
    b_ih, b_hh = params["b_ih"], params["b_hh"]
    w_fc, b_fc = params["w_fc"], params["b_fc"]

    B, S, F = x.shape
    H = w_hh.shape[1]
    O = w_fc.shape[0]
    f32 = jnp.float32

    Bp = _round_up(B, 8)            # sublane tile
    Hp = _round_up(H, 128)          # lane tile (per gate)
    Op = _round_up(O, 128)          # lane-dense fc output
    Tb = min(t_block, S)            # timesteps per grid step (VMEM-sized chunk)
    Sp = _round_up(S, Tb)

    # Pre-transposed, gate-padded weights; pre-summed bias (done once in HBM).
    wih_t = jnp.zeros((F, 4, Hp), f32).at[:, :, :H].set(
        jnp.transpose(w_ih).astype(f32).reshape(F, 4, H)).reshape(F, 4 * Hp)
    whh_t = jnp.zeros((Hp, 4, Hp), f32).at[:H, :, :H].set(
        jnp.transpose(w_hh).astype(f32).reshape(H, 4, H)).reshape(Hp, 4 * Hp)
    bias = jnp.zeros((4, Hp), f32).at[:, :H].set(
        (b_ih + b_hh).astype(f32).reshape(4, H)).reshape(1, 4 * Hp)
    wfc_t = jnp.zeros((Hp, Op), f32).at[:H, :O].set(jnp.transpose(w_fc).astype(f32))
    bfc = jnp.zeros((1, Op), f32).at[0, :O].set(b_fc.astype(f32))

    # Time-major, batch/seq padded input.
    x_tm = jnp.zeros((Sp, Bp, F), f32).at[:S, :B, :].set(
        jnp.transpose(x, (1, 0, 2)).astype(f32))

    h0p = jnp.zeros((Bp, Hp), f32)
    c0p = jnp.zeros((Bp, Hp), f32)
    if hidden is not None:
        h0p = h0p.at[:B, :H].set(hidden[0].reshape(B, H).astype(f32))
        c0p = c0p.at[:B, :H].set(hidden[1].reshape(B, H).astype(f32))

    tm = Bp * Tb

    # (1) Input projection hoisted out of the recurrence: one big matmul.
    gx = _matmul_bias(x_tm.reshape(Sp * Bp, F), wih_t, bias, tm=tm)
    gx = gx.reshape(Sp, Bp, 4 * Hp)

    # (2) Sequential recurrence, chunked over time.
    kernel = functools.partial(
        _lstm_recurrence_kernel, seq_len=S, t_block=Tb, needs_mask=(Sp != S))
    hist, hn, cn = pl.pallas_call(
        kernel,
        out_shape=(
            jax.ShapeDtypeStruct((Sp, Bp, Hp), f32),   # h history
            jax.ShapeDtypeStruct((Bp, Hp), f32),       # h_n
            jax.ShapeDtypeStruct((Bp, Hp), f32),       # c_n
        ),
        grid_spec=pltpu.PrefetchScalarGridSpec(
            num_scalar_prefetch=0,
            grid=(Sp // Tb,),
            in_specs=[
                pl.BlockSpec((Tb, Bp, 4 * Hp), lambda t: (t, 0, 0)),   # gates_x
                pl.BlockSpec((Hp, 4 * Hp), lambda t: (0, 0)),          # W_hh^T
                pl.BlockSpec((Bp, Hp), lambda t: (0, 0)),              # h0
                pl.BlockSpec((Bp, Hp), lambda t: (0, 0)),              # c0
            ],
            out_specs=[
                pl.BlockSpec((Tb, Bp, Hp), lambda t: (t, 0, 0)),       # h history
                pl.BlockSpec((Bp, Hp), lambda t: (0, 0)),              # h_n
                pl.BlockSpec((Bp, Hp), lambda t: (0, 0)),              # c_n
            ],
        ),
        compiler_params=pltpu.CompilerParams(
            dimension_semantics=("arbitrary",)),   # recurrence: must run in order
    )(gx, whh_t, h0p, c0p)

    # (3) Dropout (eval) is identity; fc projection hoisted into one lane-dense matmul.
    out = _matmul_bias(hist.reshape(Sp * Bp, Hp), wfc_t, bfc, tm=tm)
    preds = jnp.transpose(out.reshape(Sp, Bp, Op)[:S, :B, :O], (1, 0, 2))

    h_n = hn[:B, :H][None, ...]
    c_n = cn[:B, :H][None, ...]
    return preds, (h_n, c_n)


# --------------------------------------------------------------------------- #
# Params / reference / test                                                    #
# --------------------------------------------------------------------------- #
def init_params(key, input_dim, hidden_dim, output_dim, midi_feature_dim):
    """Deterministic init, same shapes / uniform(-1/sqrt(H)) scheme as PyTorch."""
    F = input_dim + midi_feature_dim
    H = hidden_dim
    k = 1.0 / jnp.sqrt(jnp.float32(H))
    ks = jax.random.split(key, 6)
    u = lambda kk, shape: jax.random.uniform(kk, shape, jnp.float32, -k, k)  # noqa: E731
    return {
        "w_ih": u(ks[0], (4 * H, F)),
        "w_hh": u(ks[1], (4 * H, H)),
        "b_ih": u(ks[2], (4 * H,)),
        "b_hh": u(ks[3], (4 * H,)),
        "w_fc": u(ks[4], (output_dim, H)),
        "b_fc": u(ks[5], (output_dim,)),
    }


def _reference_forward(x, params):
    """Pure-JAX reference (lax.scan LSTM) for correctness checking."""
    w_ih, w_hh, b_ih, b_hh, w_fc, b_fc = (
        params["w_ih"], params["w_hh"], params["b_ih"],
        params["b_hh"], params["w_fc"], params["b_fc"])
    B, S, _ = x.shape
    H = w_hh.shape[1]

    def step(carry, x_t):
        h, c = carry
        gates = x_t @ w_ih.T + h @ w_hh.T + b_ih + b_hh
        i = jax.nn.sigmoid(gates[:, 0 * H:1 * H])
        f = jax.nn.sigmoid(gates[:, 1 * H:2 * H])
        g = jnp.tanh(gates[:, 2 * H:3 * H])
        o = jax.nn.sigmoid(gates[:, 3 * H:4 * H])
        c = f * c + i * g
        h = o * jnp.tanh(c)
        return (h, c), h

    init = (jnp.zeros((B, H), jnp.float32), jnp.zeros((B, H), jnp.float32))
    (h_n, c_n), hs = jax.lax.scan(step, init, jnp.transpose(x, (1, 0, 2)))
    preds = jnp.einsum("sbh,oh->sbo", hs, w_fc) + b_fc
    return jnp.transpose(preds, (1, 0, 2)), (h_n[None], c_n[None])


if __name__ == "__main__":
    # Small shapes consistent with the module's forward signature.
    batch, seq_len = 2, 8
    input_dim, midi_feature_dim = 6, 2
    hidden_dim, output_dim = 32, 16

    key = jax.random.PRNGKey(0)
    k_x, k_p = jax.random.split(key)
    params = init_params(k_p, input_dim, hidden_dim, output_dim, midi_feature_dim)
    x = jax.random.normal(
        k_x, (batch, seq_len, input_dim + midi_feature_dim), jnp.float32)

    fwd = jax.jit(lyrics_midi_lstm_forward)
    preds, (h_n, c_n) = fwd(x, params)
    jax.block_until_ready((preds, h_n, c_n))

    # sanity check vs pure-JAX reference
    ref_preds, (ref_h, ref_c) = _reference_forward(x, params)
    assert preds.shape == (batch, seq_len, output_dim)
    assert h_n.shape == (1, batch, hidden_dim) and c_n.shape == (1, batch, hidden_dim)
    assert jnp.allclose(preds, ref_preds, rtol=1e-4, atol=1e-4)
    assert jnp.allclose(h_n, ref_h, rtol=1e-4, atol=1e-4)
    assert jnp.allclose(c_n, ref_c, rtol=1e-4, atol=1e-4)

    print("KERNEL_OK")
</pallas_src>

<mosaic_0001>
module attributes {stable_mosaic.version = 11 : i64} {
  func.func @_lstm_recurrence_kernel(%arg0: i32, %arg1: memref<8x8x512xf32, #tpu.memory_space<vmem>>, %arg2: memref<128x512xf32, #tpu.memory_space<vmem>>, %arg3: memref<8x128xf32, #tpu.memory_space<vmem>>, %arg4: memref<8x128xf32, #tpu.memory_space<vmem>>, %arg5: memref<8x8x128xf32, #tpu.memory_space<vmem>>, %arg6: memref<8x128xf32, #tpu.memory_space<vmem>>, %arg7: memref<8x128xf32, #tpu.memory_space<vmem>>) attributes {dimension_semantics = [#tpu.dimension_semantics<arbitrary>], iteration_bounds = array<i64: 1>, scalar_prefetch = 0 : i64, scratch_operands = 0 : i64, tpu.core_type = #tpu.core_type<tc>, window_params = [{transform_indices = @transform_0, window_bounds = array<i64: 8, 8, 512>}, {pipeline_mode = #tpu.pipeline_mode<synchronous>, transform_indices = @transform_1, window_bounds = array<i64: 128, 512>}, {pipeline_mode = #tpu.pipeline_mode<synchronous>, transform_indices = @transform_2, window_bounds = array<i64: 8, 128>}, {pipeline_mode = #tpu.pipeline_mode<synchronous>, transform_indices = @transform_3, window_bounds = array<i64: 8, 128>}, {transform_indices = @transform_4, window_bounds = array<i64: 8, 8, 128>}, {pipeline_mode = #tpu.pipeline_mode<synchronous>, transform_indices = @transform_5, window_bounds = array<i64: 8, 128>}, {pipeline_mode = #tpu.pipeline_mode<synchronous>, transform_indices = @transform_6, window_bounds = array<i64: 8, 128>}]} {
    %c0_i32 = arith.constant 0 : i32
    %0 = arith.cmpi eq, %arg0, %c0_i32 : i32
    %1 = arith.extui %0 : i1 to i32
    %c0_i32_0 = arith.constant 0 : i32
    %2 = arith.cmpi ne, %1, %c0_i32_0 : i32
    scf.if %2 {
      %c0_74 = arith.constant 0 : index
      %c0_75 = arith.constant 0 : index
      %280 = vector.load %arg3[%c0_74, %c0_75] : memref<8x128xf32, #tpu.memory_space<vmem>>, vector<8x128xf32>
      %c0_76 = arith.constant 0 : index
      %c0_77 = arith.constant 0 : index
      %281 = vector.load %arg6[%c0_76, %c0_77] : memref<8x128xf32, #tpu.memory_space<vmem>>, vector<8x128xf32>
      tpu.vector_store %arg6[%c0_76, %c0_77], %280 {strides = array<i32>} : memref<8x128xf32, #tpu.memory_space<vmem>>, vector<8x128xf32>,
      %c0_78 = arith.constant 0 : index
      %c0_79 = arith.constant 0 : index
      %282 = vector.load %arg4[%c0_78, %c0_79] : memref<8x128xf32, #tpu.memory_space<vmem>>, vector<8x128xf32>
      %c0_80 = arith.constant 0 : index
      %c0_81 = arith.constant 0 : index
      %283 = vector.load %arg7[%c0_80, %c0_81] : memref<8x128xf32, #tpu.memory_space<vmem>>, vector<8x128xf32>
      tpu.vector_store %arg7[%c0_80, %c0_81], %282 {strides = array<i32>} : memref<8x128xf32, #tpu.memory_space<vmem>>, vector<8x128xf32>,
    } else {
    }
    %c0 = arith.constant 0 : index
    %c0_1 = arith.constant 0 : index
    %3 = vector.load %arg2[%c0, %c0_1] : memref<128x512xf32, #tpu.memory_space<vmem>>, vector<128x512xf32>
    %c0_2 = arith.constant 0 : index
    %c0_3 = arith.constant 0 : index
    %4 = vector.load %arg6[%c0_2, %c0_3] : memref<8x128xf32, #tpu.memory_space<vmem>>, vector<8x128xf32>
    %c0_4 = arith.constant 0 : index
    %c0_5 = arith.constant 0 : index
    %5 = vector.load %arg7[%c0_4, %c0_5] : memref<8x128xf32, #tpu.memory_space<vmem>>, vector<8x128xf32>
    %c0_i32_6 = arith.constant 0 : i32
    %6 = arith.index_cast %c0_i32_6 : i32 to index
    %c0_7 = arith.constant 0 : index
    %c0_8 = arith.constant 0 : index
    %7 = vector.load %arg1[%6, %c0_7, %c0_8] : memref<8x8x512xf32, #tpu.memory_space<vmem>>, vector<1x8x512xf32>
    %8 = vector.shape_cast %7 : vector<1x8x512xf32> to vector<8x512xf32>
    %cst = arith.constant dense<0.000000e+00> : vector<8x512xf32>
    %9 = tpu.matmul %4, %3, %cst {dimension_numbers = #tpu.dot_dimension_numbers<[1], [0], [0], [1], [0, 0, 1, 1], [], []>} : vector<8x128xf32>, vector<128x512xf32>, vector<8x512xf32> -> vector<8x512xf32>
    %10 = arith.addf %8, %9 : vector<8x512xf32>
    %11 = vector.extract_strided_slice %10 {offsets = [0, 0], sizes = [8, 128], strides = [1, 1]} : vector<8x512xf32> to vector<8x128xf32>
    %12 = arith.negf %11 : vector<8x128xf32>
    %13 = math.exp %12 : vector<8x128xf32>
    %cst_9 = arith.constant 1.000000e+00 : f32
    %14 = vector.broadcast %cst_9 : f32 to vector<8x128xf32>
    %15 = arith.addf %14, %13 : vector<8x128xf32>
    %16 = arith.divf %14, %15 : vector<8x128xf32>
    %17 = vector.extract_strided_slice %10 {offsets = [0, 128], sizes = [8, 128], strides = [1, 1]} : vector<8x512xf32> to vector<8x128xf32>
    %18 = arith.negf %17 : vector<8x128xf32>
    %19 = math.exp %18 : vector<8x128xf32>
    %cst_10 = arith.constant 1.000000e+00 : f32
    %20 = vector.broadcast %cst_10 : f32 to vector<8x128xf32>
    %21 = arith.addf %20, %19 : vector<8x128xf32>
    %22 = arith.divf %20, %21 : vector<8x128xf32>
    %23 = vector.extract_strided_slice %10 {offsets = [0, 256], sizes = [8, 128], strides = [1, 1]} : vector<8x512xf32> to vector<8x128xf32>
    %24 = math.tanh %23 : vector<8x128xf32>
    %25 = vector.extract_strided_slice %10 {offsets = [0, 384], sizes = [8, 128], strides = [1, 1]} : vector<8x512xf32> to vector<8x128xf32>
    %26 = arith.negf %25 : vector<8x128xf32>
    %27 = math.exp %26 : vector<8x128xf32>
    %cst_11 = arith.constant 1.000000e+00 : f32
    %28 = vector.broadcast %cst_11 : f32 to vector<8x128xf32>
    %29 = arith.addf %28, %27 : vector<8x128xf32>
    %30 = arith.divf %28, %29 : vector<8x128xf32>
    %31 = arith.mulf %22, %5 : vector<8x128xf32>
    %32 = arith.mulf %16, %24 : vector<8x128xf32>
    %33 = arith.addf %31, %32 : vector<8x128xf32>
    %34 = math.tanh %33 : vector<8x128xf32>
    %35 = arith.mulf %30, %34 : vector<8x128xf32>
    %36 = arith.index_cast %c0_i32_6 : i32 to index
    %c0_12 = arith.constant 0 : index
    %c0_13 = arith.constant 0 : index
    %37 = vector.load %arg5[%36, %c0_12, %c0_13] : memref<8x8x128xf32, #tpu.memory_space<vmem>>, vector<1x8x128xf32>
    %38 = vector.shape_cast %37 : vector<1x8x128xf32> to vector<8x128xf32>
    %39 = vector.shape_cast %35 : vector<8x128xf32> to vector<1x8x128xf32>
    tpu.vector_store %arg5[%36, %c0_12, %c0_13], %39 {strides = array<i32>} : memref<8x8x128xf32, #tpu.memory_space<vmem>>, vector<1x8x128xf32>,
    %c1_i32 = arith.constant 1 : i32
    %40 = arith.index_cast %c1_i32 : i32 to index
    %c0_14 = arith.constant 0 : index
    %c0_15 = arith.constant 0 : index
    %41 = vector.load %arg1[%40, %c0_14, %c0_15] : memref<8x8x512xf32, #tpu.memory_space<vmem>>, vector<1x8x512xf32>
    %42 = vector.shape_cast %41 : vector<1x8x512xf32> to vector<8x512xf32>
    %cst_16 = arith.constant dense<0.000000e+00> : vector<8x512xf32>
    %43 = tpu.matmul %35, %3, %cst_16 {dimension_numbers = #tpu.dot_dimension_numbers<[1], [0], [0], [1], [0, 0, 1, 1], [], []>} : vector<8x128xf32>, vector<128x512xf32>, vector<8x512xf32> -> vector<8x512xf32>
    %44 = arith.addf %42, %43 : vector<8x512xf32>
    %45 = vector.extract_strided_slice %44 {offsets = [0, 0], sizes = [8, 128], strides = [1, 1]} : vector<8x512xf32> to vector<8x128xf32>
    %46 = arith.negf %45 : vector<8x128xf32>
    %47 = math.exp %46 : vector<8x128xf32>
    %cst_17 = arith.constant 1.000000e+00 : f32
    %48 = vector.broadcast %cst_17 : f32 to vector<8x128xf32>
    %49 = arith.addf %48, %47 : vector<8x128xf32>
    %50 = arith.divf %48, %49 : vector<8x128xf32>
    %51 = vector.extract_strided_slice %44 {offsets = [0, 128], sizes = [8, 128], strides = [1, 1]} : vector<8x512xf32> to vector<8x128xf32>
    %52 = arith.negf %51 : vector<8x128xf32>
    %53 = math.exp %52 : vector<8x128xf32>
    %cst_18 = arith.constant 1.000000e+00 : f32
    %54 = vector.broadcast %cst_18 : f32 to vector<8x128xf32>
    %55 = arith.addf %54, %53 : vector<8x128xf32>
    %56 = arith.divf %54, %55 : vector<8x128xf32>
    %57 = vector.extract_strided_slice %44 {offsets = [0, 256], sizes = [8, 128], strides = [1, 1]} : vector<8x512xf32> to vector<8x128xf32>
    %58 = math.tanh %57 : vector<8x128xf32>
    %59 = vector.extract_strided_slice %44 {offsets = [0, 384], sizes = [8, 128], strides = [1, 1]} : vector<8x512xf32> to vector<8x128xf32>
    %60 = arith.negf %59 : vector<8x128xf32>
    %61 = math.exp %60 : vector<8x128xf32>
    %cst_19 = arith.constant 1.000000e+00 : f32
    %62 = vector.broadcast %cst_19 : f32 to vector<8x128xf32>
    %63 = arith.addf %62, %61 : vector<8x128xf32>
    %64 = arith.divf %62, %63 : vector<8x128xf32>
    %65 = arith.mulf %56, %33 : vector<8x128xf32>
    %66 = arith.mulf %50, %58 : vector<8x128xf32>
    %67 = arith.addf %65, %66 : vector<8x128xf32>
    %68 = math.tanh %67 : vector<8x128xf32>
    %69 = arith.mulf %64, %68 : vector<8x128xf32>
    %70 = arith.index_cast %c1_i32 : i32 to index
    %c0_20 = arith.constant 0 : index
    %c0_21 = arith.constant 0 : index
    %71 = vector.load %arg5[%70, %c0_20, %c0_21] : memref<8x8x128xf32, #tpu.memory_space<vmem>>, vector<1x8x128xf32>
    %72 = vector.shape_cast %71 : vector<1x8x128xf32> to vector<8x128xf32>
    %73 = vector.shape_cast %69 : vector<8x128xf32> to vector<1x8x128xf32>
    tpu.vector_store %arg5[%70, %c0_20, %c0_21], %73 {strides = array<i32>} : memref<8x8x128xf32, #tpu.memory_space<vmem>>, vector<1x8x128xf32>,
    %c2_i32 = arith.constant 2 : i32
    %74 = arith.index_cast %c2_i32 : i32 to index
    %c0_22 = arith.constant 0 : index
    %c0_23 = arith.constant 0 : index
    %75 = vector.load %arg1[%74, %c0_22, %c0_23] : memref<8x8x512xf32, #tpu.memory_space<vmem>>, vector<1x8x512xf32>
    %76 = vector.shape_cast %75 : vector<1x8x512xf32> to vector<8x512xf32>
    %cst_24 = arith.constant dense<0.000000e+00> : vector<8x512xf32>
    %77 = tpu.matmul %69, %3, %cst_24 {dimension_numbers = #tpu.dot_dimension_numbers<[1], [0], [0], [1], [0, 0, 1, 1], [], []>} : vector<8x128xf32>, vector<128x512xf32>, vector<8x512xf32> -> vector<8x512xf32>
    %78 = arith.addf %76, %77 : vector<8x512xf32>
    %79 = vector.extract_strided_slice %78 {offsets = [0, 0], sizes = [8, 128], strides = [1, 1]} : vector<8x512xf32> to vector<8x128xf32>
    %80 = arith.negf %79 : vector<8x128xf32>
    %81 = math.exp %80 : vector<8x128xf32>
    %cst_25 = arith.constant 1.000000e+00 : f32
    %82 = vector.broadcast %cst_25 : f32 to vector<8x128xf32>
    %83 = arith.addf %82, %81 : vector<8x128xf32>
    %84 = arith.divf %82, %83 : vector<8x128xf32>
    %85 = vector.extract_strided_slice %78 {offsets = [0, 128], sizes = [8, 128], strides = [1, 1]} : vector<8x512xf32> to vector<8x128xf32>
    %86 = arith.negf %85 : vector<8x128xf32>
    %87 = math.exp %86 : vector<8x128xf32>
    %cst_26 = arith.constant 1.000000e+00 : f32
    %88 = vector.broadcast %cst_26 : f32 to vector<8x128xf32>
    %89 = arith.addf %88, %87 : vector<8x128xf32>
    %90 = arith.divf %88, %89 : vector<8x128xf32>
    %91 = vector.extract_strided_slice %78 {offsets = [0, 256], sizes = [8, 128], strides = [1, 1]} : vector<8x512xf32> to vector<8x128xf32>
    %92 = math.tanh %91 : vector<8x128xf32>
    %93 = vector.extract_strided_slice %78 {offsets = [0, 384], sizes = [8, 128], strides = [1, 1]} : vector<8x512xf32> to vector<8x128xf32>
    %94 = arith.negf %93 : vector<8x128xf32>
    %95 = math.exp %94 : vector<8x128xf32>
    %cst_27 = arith.constant 1.000000e+00 : f32
    %96 = vector.broadcast %cst_27 : f32 to vector<8x128xf32>
    %97 = arith.addf %96, %95 : vector<8x128xf32>
    %98 = arith.divf %96, %97 : vector<8x128xf32>
    %99 = arith.mulf %90, %67 : vector<8x128xf32>
    %100 = arith.mulf %84, %92 : vector<8x128xf32>
    %101 = arith.addf %99, %100 : vector<8x128xf32>
    %102 = math.tanh %101 : vector<8x128xf32>
    %103 = arith.mulf %98, %102 : vector<8x128xf32>
    %104 = arith.index_cast %c2_i32 : i32 to index
    %c0_28 = arith.constant 0 : index
    %c0_29 = arith.constant 0 : index
    %105 = vector.load %arg5[%104, %c0_28, %c0_29] : memref<8x8x128xf32, #tpu.memory_space<vmem>>, vector<1x8x128xf32>
    %106 = vector.shape_cast %105 : vector<1x8x128xf32> to vector<8x128xf32>
    %107 = vector.shape_cast %103 : vector<8x128xf32> to vector<1x8x128xf32>
    tpu.vector_store %arg5[%104, %c0_28, %c0_29], %107 {strides = array<i32>} : memref<8x8x128xf32, #tpu.memory_space<vmem>>, vector<1x8x128xf32>,
    %c3_i32 = arith.constant 3 : i32
    %108 = arith.index_cast %c3_i32 : i32 to index
    %c0_30 = arith.constant 0 : index
    %c0_31 = arith.constant 0 : index
    %109 = vector.load %arg1[%108, %c0_30, %c0_31] : memref<8x8x512xf32, #tpu.memory_space<vmem>>, vector<1x8x512xf32>
    %110 = vector.shape_cast %109 : vector<1x8x512xf32> to vector<8x512xf32>
    %cst_32 = arith.constant dense<0.000000e+00> : vector<8x512xf32>
    %111 = tpu.matmul %103, %3, %cst_32 {dimension_numbers = #tpu.dot_dimension_numbers<[1], [0], [0], [1], [0, 0, 1, 1], [], []>} : vector<8x128xf32>, vector<128x512xf32>, vector<8x512xf32> -> vector<8x512xf32>
    %112 = arith.addf %110, %111 : vector<8x512xf32>
    %113 = vector.extract_strided_slice %112 {offsets = [0, 0], sizes = [8, 128], strides = [1, 1]} : vector<8x512xf32> to vector<8x128xf32>
    %114 = arith.negf %113 : vector<8x128xf32>
    %115 = math.exp %114 : vector<8x128xf32>
    %cst_33 = arith.constant 1.000000e+00 : f32
    %116 = vector.broadcast %cst_33 : f32 to vector<8x128xf32>
    %117 = arith.addf %116, %115 : vector<8x128xf32>
    %118 = arith.divf %116, %117 : vector<8x128xf32>
    %119 = vector.extract_strided_slice %112 {offsets = [0, 128], sizes = [8, 128], strides = [1, 1]} : vector<8x512xf32> to vector<8x128xf32>
    %120 = arith.negf %119 : vector<8x128xf32>
    %121 = math.exp %120 : vector<8x128xf32>
    %cst_34 = arith.constant 1.000000e+00 : f32
    %122 = vector.broadcast %cst_34 : f32 to vector<8x128xf32>
    %123 = arith.addf %122, %121 : vector<8x128xf32>
    %124 = arith.divf %122, %123 : vector<8x128xf32>
    %125 = vector.extract_strided_slice %112 {offsets = [0, 256], sizes = [8, 128], strides = [1, 1]} : vector<8x512xf32> to vector<8x128xf32>
    %126 = math.tanh %125 : vector<8x128xf32>
    %127 = vector.extract_strided_slice %112 {offsets = [0, 384], sizes = [8, 128], strides = [1, 1]} : vector<8x512xf32> to vector<8x128xf32>
    %128 = arith.negf %127 : vector<8x128xf32>
    %129 = math.exp %128 : vector<8x128xf32>
    %cst_35 = arith.constant 1.000000e+00 : f32
    %130 = vector.broadcast %cst_35 : f32 to vector<8x128xf32>
    %131 = arith.addf %130, %129 : vector<8x128xf32>
    %132 = arith.divf %130, %131 : vector<8x128xf32>
    %133 = arith.mulf %124, %101 : vector<8x128xf32>
    %134 = arith.mulf %118, %126 : vector<8x128xf32>
    %135 = arith.addf %133, %134 : vector<8x128xf32>
    %136 = math.tanh %135 : vector<8x128xf32>
    %137 = arith.mulf %132, %136 : vector<8x128xf32>
    %138 = arith.index_cast %c3_i32 : i32 to index
    %c0_36 = arith.constant 0 : index
    %c0_37 = arith.constant 0 : index
    %139 = vector.load %arg5[%138, %c0_36, %c0_37] : memref<8x8x128xf32, #tpu.memory_space<vmem>>, vector<1x8x128xf32>
    %140 = vector.shape_cast %139 : vector<1x8x128xf32> to vector<8x128xf32>
    %141 = vector.shape_cast %137 : vector<8x128xf32> to vector<1x8x128xf32>
    tpu.vector_store %arg5[%138, %c0_36, %c0_37], %141 {strides = array<i32>} : memref<8x8x128xf32, #tpu.memory_space<vmem>>, vector<1x8x128xf32>,
    %c4_i32 = arith.constant 4 : i32
    %142 = arith.index_cast %c4_i32 : i32 to index
    %c0_38 = arith.constant 0 : index
    %c0_39 = arith.constant 0 : index
    %143 = vector.load %arg1[%142, %c0_38, %c0_39] : memref<8x8x512xf32, #tpu.memory_space<vmem>>, vector<1x8x512xf32>
    %144 = vector.shape_cast %143 : vector<1x8x512xf32> to vector<8x512xf32>
    %cst_40 = arith.constant dense<0.000000e+00> : vector<8x512xf32>
    %145 = tpu.matmul %137, %3, %cst_40 {dimension_numbers = #tpu.dot_dimension_numbers<[1], [0], [0], [1], [0, 0, 1, 1], [], []>} : vector<8x128xf32>, vector<128x512xf32>, vector<8x512xf32> -> vector<8x512xf32>
    %146 = arith.addf %144, %145 : vector<8x512xf32>
    %147 = vector.extract_strided_slice %146 {offsets = [0, 0], sizes = [8, 128], strides = [1, 1]} : vector<8x512xf32> to vector<8x128xf32>
    %148 = arith.negf %147 : vector<8x128xf32>
    %149 = math.exp %148 : vector<8x128xf32>
    %cst_41 = arith.constant 1.000000e+00 : f32
    %150 = vector.broadcast %cst_41 : f32 to vector<8x128xf32>
    %151 = arith.addf %150, %149 : vector<8x128xf32>
    %152 = arith.divf %150, %151 : vector<8x128xf32>
    %153 = vector.extract_strided_slice %146 {offsets = [0, 128], sizes = [8, 128], strides = [1, 1]} : vector<8x512xf32> to vector<8x128xf32>
    %154 = arith.negf %153 : vector<8x128xf32>
    %155 = math.exp %154 : vector<8x128xf32>
    %cst_42 = arith.constant 1.000000e+00 : f32
    %156 = vector.broadcast %cst_42 : f32 to vector<8x128xf32>
    %157 = arith.addf %156, %155 : vector<8x128xf32>
    %158 = arith.divf %156, %157 : vector<8x128xf32>
    %159 = vector.extract_strided_slice %146 {offsets = [0, 256], sizes = [8, 128], strides = [1, 1]} : vector<8x512xf32> to vector<8x128xf32>
    %160 = math.tanh %159 : vector<8x128xf32>
    %161 = vector.extract_strided_slice %146 {offsets = [0, 384], sizes = [8, 128], strides = [1, 1]} : vector<8x512xf32> to vector<8x128xf32>
    %162 = arith.negf %161 : vector<8x128xf32>
    %163 = math.exp %162 : vector<8x128xf32>
    %cst_43 = arith.constant 1.000000e+00 : f32
    %164 = vector.broadcast %cst_43 : f32 to vector<8x128xf32>
    %165 = arith.addf %164, %163 : vector<8x128xf32>
    %166 = arith.divf %164, %165 : vector<8x128xf32>
    %167 = arith.mulf %158, %135 : vector<8x128xf32>
    %168 = arith.mulf %152, %160 : vector<8x128xf32>
    %169 = arith.addf %167, %168 : vector<8x128xf32>
    %170 = math.tanh %169 : vector<8x128xf32>
    %171 = arith.mulf %166, %170 : vector<8x128xf32>
    %172 = arith.index_cast %c4_i32 : i32 to index
    %c0_44 = arith.constant 0 : index
    %c0_45 = arith.constant 0 : index
    %173 = vector.load %arg5[%172, %c0_44, %c0_45] : memref<8x8x128xf32, #tpu.memory_space<vmem>>, vector<1x8x128xf32>
    %174 = vector.shape_cast %173 : vector<1x8x128xf32> to vector<8x128xf32>
    %175 = vector.shape_cast %171 : vector<8x128xf32> to vector<1x8x128xf32>
    tpu.vector_store %arg5[%172, %c0_44, %c0_45], %175 {strides = array<i32>} : memref<8x8x128xf32, #tpu.memory_space<vmem>>, vector<1x8x128xf32>,
    %c5_i32 = arith.constant 5 : i32
    %176 = arith.index_cast %c5_i32 : i32 to index
    %c0_46 = arith.constant 0 : index
    %c0_47 = arith.constant 0 : index
    %177 = vector.load %arg1[%176, %c0_46, %c0_47] : memref<8x8x512xf32, #tpu.memory_space<vmem>>, vector<1x8x512xf32>
    %178 = vector.shape_cast %177 : vector<1x8x512xf32> to vector<8x512xf32>
    %cst_48 = arith.constant dense<0.000000e+00> : vector<8x512xf32>
    %179 = tpu.matmul %171, %3, %cst_48 {dimension_numbers = #tpu.dot_dimension_numbers<[1], [0], [0], [1], [0, 0, 1, 1], [], []>} : vector<8x128xf32>, vector<128x512xf32>, vector<8x512xf32> -> vector<8x512xf32>
    %180 = arith.addf %178, %179 : vector<8x512xf32>
    %181 = vector.extract_strided_slice %180 {offsets = [0, 0], sizes = [8, 128], strides = [1, 1]} : vector<8x512xf32> to vector<8x128xf32>
    %182 = arith.negf %181 : vector<8x128xf32>
    %183 = math.exp %182 : vector<8x128xf32>
    %cst_49 = arith.constant 1.000000e+00 : f32
    %184 = vector.broadcast %cst_49 : f32 to vector<8x128xf32>
    %185 = arith.addf %184, %183 : vector<8x128xf32>
    %186 = arith.divf %184, %185 : vector<8x128xf32>
    %187 = vector.extract_strided_slice %180 {offsets = [0, 128], sizes = [8, 128], strides = [1, 1]} : vector<8x512xf32> to vector<8x128xf32>
    %188 = arith.negf %187 : vector<8x128xf32>
    %189 = math.exp %188 : vector<8x128xf32>
    %cst_50 = arith.constant 1.000000e+00 : f32
    %190 = vector.broadcast %cst_50 : f32 to vector<8x128xf32>
    %191 = arith.addf %190, %189 : vector<8x128xf32>
    %192 = arith.divf %190, %191 : vector<8x128xf32>
    %193 = vector.extract_strided_slice %180 {offsets = [0, 256], sizes = [8, 128], strides = [1, 1]} : vector<8x512xf32> to vector<8x128xf32>
    %194 = math.tanh %193 : vector<8x128xf32>
    %195 = vector.extract_strided_slice %180 {offsets = [0, 384], sizes = [8, 128], strides = [1, 1]} : vector<8x512xf32> to vector<8x128xf32>
    %196 = arith.negf %195 : vector<8x128xf32>
    %197 = math.exp %196 : vector<8x128xf32>
    %cst_51 = arith.constant 1.000000e+00 : f32
    %198 = vector.broadcast %cst_51 : f32 to vector<8x128xf32>
    %199 = arith.addf %198, %197 : vector<8x128xf32>
    %200 = arith.divf %198, %199 : vector<8x128xf32>
    %201 = arith.mulf %192, %169 : vector<8x128xf32>
    %202 = arith.mulf %186, %194 : vector<8x128xf32>
    %203 = arith.addf %201, %202 : vector<8x128xf32>
    %204 = math.tanh %203 : vector<8x128xf32>
    %205 = arith.mulf %200, %204 : vector<8x128xf32>
    %206 = arith.index_cast %c5_i32 : i32 to index
    %c0_52 = arith.constant 0 : index
    %c0_53 = arith.constant 0 : index
    %207 = vector.load %arg5[%206, %c0_52, %c0_53] : memref<8x8x128xf32, #tpu.memory_space<vmem>>, vector<1x8x128xf32>
    %208 = vector.shape_cast %207 : vector<1x8x128xf32> to vector<8x128xf32>
    %209 = vector.shape_cast %205 : vector<8x128xf32> to vector<1x8x128xf32>
    tpu.vector_store %arg5[%206, %c0_52, %c0_53], %209 {strides = array<i32>} : memref<8x8x128xf32, #tpu.memory_space<vmem>>, vector<1x8x128xf32>,
    %c6_i32 = arith.constant 6 : i32
    %210 = arith.index_cast %c6_i32 : i32 to index
    %c0_54 = arith.constant 0 : index
    %c0_55 = arith.constant 0 : index
    %211 = vector.load %arg1[%210, %c0_54, %c0_55] : memref<8x8x512xf32, #tpu.memory_space<vmem>>, vector<1x8x512xf32>
    %212 = vector.shape_cast %211 : vector<1x8x512xf32> to vector<8x512xf32>
    %cst_56 = arith.constant dense<0.000000e+00> : vector<8x512xf32>
    %213 = tpu.matmul %205, %3, %cst_56 {dimension_numbers = #tpu.dot_dimension_numbers<[1], [0], [0], [1], [0, 0, 1, 1], [], []>} : vector<8x128xf32>, vector<128x512xf32>, vector<8x512xf32> -> vector<8x512xf32>
    %214 = arith.addf %212, %213 : vector<8x512xf32>
    %215 = vector.extract_strided_slice %214 {offsets = [0, 0], sizes = [8, 128], strides = [1, 1]} : vector<8x512xf32> to vector<8x128xf32>
    %216 = arith.negf %215 : vector<8x128xf32>
    %217 = math.exp %216 : vector<8x128xf32>
    %cst_57 = arith.constant 1.000000e+00 : f32
    %218 = vector.broadcast %cst_57 : f32 to vector<8x128xf32>
    %219 = arith.addf %218, %217 : vector<8x128xf32>
    %220 = arith.divf %218, %219 : vector<8x128xf32>
    %221 = vector.extract_strided_slice %214 {offsets = [0, 128], sizes = [8, 128], strides = [1, 1]} : vector<8x512xf32> to vector<8x128xf32>
    %222 = arith.negf %221 : vector<8x128xf32>
    %223 = math.exp %222 : vector<8x128xf32>
    %cst_58 = arith.constant 1.000000e+00 : f32
    %224 = vector.broadcast %cst_58 : f32 to vector<8x128xf32>
    %225 = arith.addf %224, %223 : vector<8x128xf32>
    %226 = arith.divf %224, %225 : vector<8x128xf32>
    %227 = vector.extract_strided_slice %214 {offsets = [0, 256], sizes = [8, 128], strides = [1, 1]} : vector<8x512xf32> to vector<8x128xf32>
    %228 = math.tanh %227 : vector<8x128xf32>
    %229 = vector.extract_strided_slice %214 {offsets = [0, 384], sizes = [8, 128], strides = [1, 1]} : vector<8x512xf32> to vector<8x128xf32>
    %230 = arith.negf %229 : vector<8x128xf32>
    %231 = math.exp %230 : vector<8x128xf32>
    %cst_59 = arith.constant 1.000000e+00 : f32
    %232 = vector.broadcast %cst_59 : f32 to vector<8x128xf32>
    %233 = arith.addf %232, %231 : vector<8x128xf32>
    %234 = arith.divf %232, %233 : vector<8x128xf32>
    %235 = arith.mulf %226, %203 : vector<8x128xf32>
    %236 = arith.mulf %220, %228 : vector<8x128xf32>
    %237 = arith.addf %235, %236 : vector<8x128xf32>
    %238 = math.tanh %237 : vector<8x128xf32>
    %239 = arith.mulf %234, %238 : vector<8x128xf32>
    %240 = arith.index_cast %c6_i32 : i32 to index
    %c0_60 = arith.constant 0 : index
    %c0_61 = arith.constant 0 : index
    %241 = vector.load %arg5[%240, %c0_60, %c0_61] : memref<8x8x128xf32, #tpu.memory_space<vmem>>, vector<1x8x128xf32>
    %242 = vector.shape_cast %241 : vector<1x8x128xf32> to vector<8x128xf32>
    %243 = vector.shape_cast %239 : vector<8x128xf32> to vector<1x8x128xf32>
    tpu.vector_store %arg5[%240, %c0_60, %c0_61], %243 {strides = array<i32>} : memref<8x8x128xf32, #tpu.memory_space<vmem>>, vector<1x8x128xf32>,
    %c7_i32 = arith.constant 7 : i32
    %244 = arith.index_cast %c7_i32 : i32 to index
    %c0_62 = arith.constant 0 : index
    %c0_63 = arith.constant 0 : index
    %245 = vector.load %arg1[%244, %c0_62, %c0_63] : memref<8x8x512xf32, #tpu.memory_space<vmem>>, vector<1x8x512xf32>
    %246 = vector.shape_cast %245 : vector<1x8x512xf32> to vector<8x512xf32>
    %cst_64 = arith.constant dense<0.000000e+00> : vector<8x512xf32>
    %247 = tpu.matmul %239, %3, %cst_64 {dimension_numbers = #tpu.dot_dimension_numbers<[1], [0], [0], [1], [0, 0, 1, 1], [], []>} : vector<8x128xf32>, vector<128x512xf32>, vector<8x512xf32> -> vector<8x512xf32>
    %248 = arith.addf %246, %247 : vector<8x512xf32>
    %249 = vector.extract_strided_slice %248 {offsets = [0, 0], sizes = [8, 128], strides = [1, 1]} : vector<8x512xf32> to vector<8x128xf32>
    %250 = arith.negf %249 : vector<8x128xf32>
    %251 = math.exp %250 : vector<8x128xf32>
    %cst_65 = arith.constant 1.000000e+00 : f32
    %252 = vector.broadcast %cst_65 : f32 to vector<8x128xf32>
    %253 = arith.addf %252, %251 : vector<8x128xf32>
    %254 = arith.divf %252, %253 : vector<8x128xf32>
    %255 = vector.extract_strided_slice %248 {offsets = [0, 128], sizes = [8, 128], strides = [1, 1]} : vector<8x512xf32> to vector<8x128xf32>
    %256 = arith.negf %255 : vector<8x128xf32>
    %257 = math.exp %256 : vector<8x128xf32>
    %cst_66 = arith.constant 1.000000e+00 : f32
    %258 = vector.broadcast %cst_66 : f32 to vector<8x128xf32>
    %259 = arith.addf %258, %257 : vector<8x128xf32>
    %260 = arith.divf %258, %259 : vector<8x128xf32>
    %261 = vector.extract_strided_slice %248 {offsets = [0, 256], sizes = [8, 128], strides = [1, 1]} : vector<8x512xf32> to vector<8x128xf32>
    %262 = math.tanh %261 : vector<8x128xf32>
    %263 = vector.extract_strided_slice %248 {offsets = [0, 384], sizes = [8, 128], strides = [1, 1]} : vector<8x512xf32> to vector<8x128xf32>
    %264 = arith.negf %263 : vector<8x128xf32>
    %265 = math.exp %264 : vector<8x128xf32>
    %cst_67 = arith.constant 1.000000e+00 : f32
    %266 = vector.broadcast %cst_67 : f32 to vector<8x128xf32>
    %267 = arith.addf %266, %265 : vector<8x128xf32>
    %268 = arith.divf %266, %267 : vector<8x128xf32>
    %269 = arith.mulf %260, %237 : vector<8x128xf32>
    %270 = arith.mulf %254, %262 : vector<8x128xf32>
    %271 = arith.addf %269, %270 : vector<8x128xf32>
    %272 = math.tanh %271 : vector<8x128xf32>
    %273 = arith.mulf %268, %272 : vector<8x128xf32>
    %274 = arith.index_cast %c7_i32 : i32 to index
    %c0_68 = arith.constant 0 : index
    %c0_69 = arith.constant 0 : index
    %275 = vector.load %arg5[%274, %c0_68, %c0_69] : memref<8x8x128xf32, #tpu.memory_space<vmem>>, vector<1x8x128xf32>
    %276 = vector.shape_cast %275 : vector<1x8x128xf32> to vector<8x128xf32>
    %277 = vector.shape_cast %273 : vector<8x128xf32> to vector<1x8x128xf32>
    tpu.vector_store %arg5[%274, %c0_68, %c0_69], %277 {strides = array<i32>} : memref<8x8x128xf32, #tpu.memory_space<vmem>>, vector<1x8x128xf32>,
    %c8_i32 = arith.constant 8 : i32
    %c0_70 = arith.constant 0 : index
    %c0_71 = arith.constant 0 : index
    %278 = vector.load %arg6[%c0_70, %c0_71] : memref<8x128xf32, #tpu.memory_space<vmem>>, vector<8x128xf32>
    tpu.vector_store %arg6[%c0_70, %c0_71], %273 {strides = array<i32>} : memref<8x128xf32, #tpu.memory_space<vmem>>, vector<8x128xf32>,
    %c0_72 = arith.constant 0 : index
    %c0_73 = arith.constant 0 : index
    %279 = vector.load %arg7[%c0_72, %c0_73] : memref<8x128xf32, #tpu.memory_space<vmem>>, vector<8x128xf32>
    tpu.vector_store %arg7[%c0_72, %c0_73], %271 {strides = array<i32>} : memref<8x128xf32, #tpu.memory_space<vmem>>, vector<8x128xf32>,
    return
  }
  func.func @transform_0(%arg0: i32) -> (i32, i32, i32) {
    %c0_i32 = arith.constant 0 : i32
    %c0_i32_0 = arith.constant 0 : i32
    %c0_i32_1 = arith.constant 0 : i32
    return %arg0, %c0_i32, %c0_i32_0 : i32, i32, i32
  }
  func.func @transform_1(%arg0: i32) -> (i32, i32) {
    %c0_i32 = arith.constant 0 : i32
    %c0_i32_0 = arith.constant 0 : i32
    %c0_i32_1 = arith.constant 0 : i32
    return %c0_i32, %c0_i32_0 : i32, i32
  }
  func.func @transform_2(%arg0: i32) -> (i32, i32) {
    %c0_i32 = arith.constant 0 : i32
    %c0_i32_0 = arith.constant 0 : i32
    %c0_i32_1 = arith.constant 0 : i32
    return %c0_i32, %c0_i32_0 : i32, i32
  }
  func.func @transform_3(%arg0: i32) -> (i32, i32) {
    %c0_i32 = arith.constant 0 : i32
    %c0_i32_0 = arith.constant 0 : i32
    %c0_i32_1 = arith.constant 0 : i32
    return %c0_i32, %c0_i32_0 : i32, i32
  }
  func.func @transform_4(%arg0: i32) -> (i32, i32, i32) {
    %c0_i32 = arith.constant 0 : i32
    %c0_i32_0 = arith.constant 0 : i32
    %c0_i32_1 = arith.constant 0 : i32
    return %arg0, %c0_i32, %c0_i32_0 : i32, i32, i32
  }
  func.func @transform_5(%arg0: i32) -> (i32, i32) {
    %c0_i32 = arith.constant 0 : i32
    %c0_i32_0 = arith.constant 0 : i32
    %c0_i32_1 = arith.constant 0 : i32
    return %c0_i32, %c0_i32_0 : i32, i32
  }
  func.func @transform_6(%arg0: i32) -> (i32, i32) {
    %c0_i32 = arith.constant 0 : i32
    %c0_i32_0 = arith.constant 0 : i32
    %c0_i32_1 = arith.constant 0 : i32
    return %c0_i32, %c0_i32_0 : i32, i32
  }
}

module attributes {stable_mosaic.version = 11 : i64} {
  func.func @_matmul_bias_kernel(%arg0: i32, %arg1: memref<64x8xf32, #tpu.memory_space<vmem>>, %arg2: memref<8x512xf32, #tpu.memory_space<vmem>>, %arg3: memref<1x512xf32, #tpu.memory_space<vmem>>, %arg4: memref<64x512xf32, #tpu.memory_space<vmem>>) attributes {dimension_semantics = [#tpu.dimension_semantics<parallel>], iteration_bounds = array<i64: 1>, scalar_prefetch = 0 : i64, scratch_operands = 0 : i64, tpu.core_type = #tpu.core_type<tc>, window_params = [{transform_indices = @transform_0, window_bounds = array<i64: 64, 8>}, {pipeline_mode = #tpu.pipeline_mode<synchronous>, transform_indices = @transform_1, window_bounds = array<i64: 8, 512>}, {pipeline_mode = #tpu.pipeline_mode<synchronous>, transform_indices = @transform_2, window_bounds = array<i64: 1, 512>}, {transform_indices = @transform_3, window_bounds = array<i64: 64, 512>}]} {
    %c0 = arith.constant 0 : index
    %c0_0 = arith.constant 0 : index
    %0 = vector.load %arg1[%c0, %c0_0] : memref<64x8xf32, #tpu.memory_space<vmem>>, vector<64x8xf32>
    %c0_1 = arith.constant 0 : index
    %c0_2 = arith.constant 0 : index
    %1 = vector.load %arg2[%c0_1, %c0_2] : memref<8x512xf32, #tpu.memory_space<vmem>>, vector<8x512xf32>
    %cst = arith.constant dense<0.000000e+00> : vector<64x512xf32>
    %2 = tpu.matmul %0, %1, %cst {dimension_numbers = #tpu.dot_dimension_numbers<[1], [0], [0], [1], [0, 0, 1, 1], [], []>} : vector<64x8xf32>, vector<8x512xf32>, vector<64x512xf32> -> vector<64x512xf32>
    %c0_3 = arith.constant 0 : index
    %c0_4 = arith.constant 0 : index
    %3 = vector.load %arg3[%c0_3, %c0_4] : memref<1x512xf32, #tpu.memory_space<vmem>>, vector<1x512xf32>
    %4 = vector.broadcast %3 : vector<1x512xf32> to vector<64x512xf32>
    %5 = arith.addf %2, %4 : vector<64x512xf32>
    %c0_5 = arith.constant 0 : index
    %c0_6 = arith.constant 0 : index
    %6 = vector.load %arg4[%c0_5, %c0_6] : memref<64x512xf32, #tpu.memory_space<vmem>>, vector<64x512xf32>
    tpu.vector_store %arg4[%c0_5, %c0_6], %5 {strides = array<i32>} : memref<64x512xf32, #tpu.memory_space<vmem>>, vector<64x512xf32>,
    return
  }
  func.func @transform_0(%arg0: i32) -> (i32, i32) {
    %c0_i32 = arith.constant 0 : i32
    %c0_i32_0 = arith.constant 0 : i32
    return %arg0, %c0_i32 : i32, i32
  }
  func.func @transform_1(%arg0: i32) -> (i32, i32) {
    %c0_i32 = arith.constant 0 : i32
    %c0_i32_0 = arith.constant 0 : i32
    %c0_i32_1 = arith.constant 0 : i32
    return %c0_i32, %c0_i32_0 : i32, i32
  }
  func.func @transform_2(%arg0: i32) -> (i32, i32) {
    %c0_i32 = arith.constant 0 : i32
    %c0_i32_0 = arith.constant 0 : i32
    %c0_i32_1 = arith.constant 0 : i32
    return %c0_i32, %c0_i32_0 : i32, i32
  }
  func.func @transform_3(%arg0: i32) -> (i32, i32) {
    %c0_i32 = arith.constant 0 : i32
    %c0_i32_0 = arith.constant 0 : i32
    return %arg0, %c0_i32 : i32, i32
  }
}

module attributes {stable_mosaic.version = 11 : i64} {
  func.func @_matmul_bias_kernel(%arg0: i32, %arg1: memref<64x128xf32, #tpu.memory_space<vmem>>, %arg2: memref<128x128xf32, #tpu.memory_space<vmem>>, %arg3: memref<1x128xf32, #tpu.memory_space<vmem>>, %arg4: memref<64x128xf32, #tpu.memory_space<vmem>>) attributes {dimension_semantics = [#tpu.dimension_semantics<parallel>], iteration_bounds = array<i64: 1>, scalar_prefetch = 0 : i64, scratch_operands = 0 : i64, tpu.core_type = #tpu.core_type<tc>, window_params = [{transform_indices = @transform_0, window_bounds = array<i64: 64, 128>}, {pipeline_mode = #tpu.pipeline_mode<synchronous>, transform_indices = @transform_1, window_bounds = array<i64: 128, 128>}, {pipeline_mode = #tpu.pipeline_mode<synchronous>, transform_indices = @transform_2, window_bounds = array<i64: 1, 128>}, {transform_indices = @transform_3, window_bounds = array<i64: 64, 128>}]} {
    %c0 = arith.constant 0 : index
    %c0_0 = arith.constant 0 : index
    %0 = vector.load %arg1[%c0, %c0_0] : memref<64x128xf32, #tpu.memory_space<vmem>>, vector<64x128xf32>
    %c0_1 = arith.constant 0 : index
    %c0_2 = arith.constant 0 : index
    %1 = vector.load %arg2[%c0_1, %c0_2] : memref<128x128xf32, #tpu.memory_space<vmem>>, vector<128x128xf32>
    %cst = arith.constant dense<0.000000e+00> : vector<64x128xf32>
    %2 = tpu.matmul %0, %1, %cst {dimension_numbers = #tpu.dot_dimension_numbers<[1], [0], [0], [1], [0, 0, 1, 1], [], []>} : vector<64x128xf32>, vector<128x128xf32>, vector<64x128xf32> -> vector<64x128xf32>
    %c0_3 = arith.constant 0 : index
    %c0_4 = arith.constant 0 : index
    %3 = vector.load %arg3[%c0_3, %c0_4] : memref<1x128xf32, #tpu.memory_space<vmem>>, vector<1x128xf32>
    %4 = vector.broadcast %3 : vector<1x128xf32> to vector<64x128xf32>
    %5 = arith.addf %2, %4 : vector<64x128xf32>
    %c0_5 = arith.constant 0 : index
    %c0_6 = arith.constant 0 : index
    %6 = vector.load %arg4[%c0_5, %c0_6] : memref<64x128xf32, #tpu.memory_space<vmem>>, vector<64x128xf32>
    tpu.vector_store %arg4[%c0_5, %c0_6], %5 {strides = array<i32>} : memref<64x128xf32, #tpu.memory_space<vmem>>, vector<64x128xf32>,
    return
  }
  func.func @transform_0(%arg0: i32) -> (i32, i32) {
    %c0_i32 = arith.constant 0 : i32
    %c0_i32_0 = arith.constant 0 : i32
    return %arg0, %c0_i32 : i32, i32
  }
  func.func @transform_1(%arg0: i32) -> (i32, i32) {
    %c0_i32 = arith.constant 0 : i32
    %c0_i32_0 = arith.constant 0 : i32
    %c0_i32_1 = arith.constant 0 : i32
    return %c0_i32, %c0_i32_0 : i32, i32
  }
  func.func @transform_2(%arg0: i32) -> (i32, i32) {
    %c0_i32 = arith.constant 0 : i32
    %c0_i32_0 = arith.constant 0 : i32
    %c0_i32_1 = arith.constant 0 : i32
    return %c0_i32, %c0_i32_0 : i32, i32
  }
  func.func @transform_3(%arg0: i32) -> (i32, i32) {
    %c0_i32 = arith.constant 0 : i32
    %c0_i32_0 = arith.constant 0 : i32
    return %arg0, %c0_i32 : i32, i32
  }
}

</mosaic_0001>

<llo_original>
// kernel: lyrics_midi_lstm_forward.5
$region0: #{lyrics_midi_lstm_forward.5}
  #allocation0 [shape = 'u32[]', space=smem, size = 0x4, offset = 0x4, fixed_abs, tag = 'smem constant byte address 0x4 - core index']
  #allocation1 [shape = 'u32[144,128]{1,0:T(1,128)}', space=vmem, size = 0x12000, scoped, tag = 'internal scratch']
  %s0 = inlined_call_operand.vmem [shape: f32[64,128], index: 0, kind: input, shape index: {}]
  %s1 = inlined_call_operand.vmem [shape: f32[128,128], index: 1, kind: input, shape index: {}]
  %s2 = inlined_call_operand.vmem [shape: f32[1,128], index: 2, kind: input, shape index: {}]
  %s3 = inlined_call_operand.vmem [shape: f32[64,128], index: 3, kind: output, shape index: {}]
  %s4 = sld [smem:[#allocation0]]
  $region22: #{lyrics_midi_lstm_forward.5} parent=0
    _
  %s6 = ssub.s32 1, %s4
  %s7 = scalar_select 0, %s6, %s4
  // Predicated region
  $region2: #{lyrics_midi_lstm_forward.5} parent=0 // pred_check
    _
  $region3: #{lyrics_midi_lstm_forward.5} parent=0 // pred_check_branch
    %9 = sbr.rel (0) target = $region5
  $region4: #{lyrics_midi_lstm_forward.5} parent=0 // pred_region
    _
  $region5: #{lyrics_midi_lstm_forward.5} parent=0 // pred_fallthru
    _
  // Predicated region
  $region6: #{lyrics_midi_lstm_forward.5} parent=0 // pred_check
    _
  $region7: #{lyrics_midi_lstm_forward.5} parent=0 // pred_check_branch
    %11 = sbr.rel (0) target = $region9
  $region8: #{lyrics_midi_lstm_forward.5} parent=0 // pred_region
    _
  $region9: #{lyrics_midi_lstm_forward.5} parent=0 // pred_fallthru
    _
  // Predicated region
  $region10: #{lyrics_midi_lstm_forward.5} parent=0 // pred_check
    _
  $region11: #{lyrics_midi_lstm_forward.5} parent=0 // pred_check_branch
    %13 = sbr.rel (0) target = $region13
  $region12: #{lyrics_midi_lstm_forward.5} parent=0 // pred_region
    _
  $region13: #{lyrics_midi_lstm_forward.5} parent=0 // pred_fallthru
    _
  %v14 = vld [vmem:[%s0] sm:$0xff]
  %v15 = vld [vmem:[%s0 + $0x8] sm:$0xff]
  %v16 = vld [vmem:[%s0 + $0x10] sm:$0xff]
  %v17 = vld [vmem:[%s0 + $0x18] sm:$0xff]
  %v18 = vld [vmem:[%s0 + $0x20] sm:$0xff]
  %v19 = vld [vmem:[%s0 + $0x28] sm:$0xff]
  %v20 = vld [vmem:[%s0 + $0x30] sm:$0xff]
  %v21 = vld [vmem:[%s0 + $0x38] sm:$0xff]
  %v22 = vld [vmem:[%s1] sm:$0xff]
  %v23 = vld [vmem:[%s1 + $0x8] sm:$0xff]
  %v24 = vld [vmem:[%s1 + $0x10] sm:$0xff]
  %v25 = vld [vmem:[%s1 + $0x18] sm:$0xff]
  %v26 = vld [vmem:[%s1 + $0x20] sm:$0xff]
  %v27 = vld [vmem:[%s1 + $0x28] sm:$0xff]
  %v28 = vld [vmem:[%s1 + $0x30] sm:$0xff]
  %v29 = vld [vmem:[%s1 + $0x38] sm:$0xff]
  %v30 = vld [vmem:[%s1 + $0x40] sm:$0xff]
  %v31 = vld [vmem:[%s1 + $0x48] sm:$0xff]
  %v32 = vld [vmem:[%s1 + $0x50] sm:$0xff]
  %v33 = vld [vmem:[%s1 + $0x58] sm:$0xff]
  %v34 = vld [vmem:[%s1 + $0x60] sm:$0xff]
  %v35 = vld [vmem:[%s1 + $0x68] sm:$0xff]
  %v36 = vld [vmem:[%s1 + $0x70] sm:$0xff]
  %v37 = vld [vmem:[%s1 + $0x78] sm:$0xff]
  %v38 = vld [vmem:[%s2] sm:$0x1]
  %v40 = vlaneseq
  %v41 = vshrl.u32 %v40, 7
  %v42 = vsub.s32 0, %v41
  %v43 = vrot.slane %v38, %v42
  %45 = vmatprep.subr.mxu0 0.0
  %46 = vmatpush1.msra.mxu0 %v37
  %47 = vmatprep.subr.mxu0 0.0
  %48 = vmatpush1.msra.mxu0 %v36
  %49 = vmatprep.subr.mxu0 0.0
  %50 = vmatpush1.msra.mxu0 %v35
  %51 = vmatprep.subr.mxu0 0.0
  %52 = vmatpush1.msra.mxu0 %v34
  %53 = vmatprep.subr.mxu0 0.0
  %54 = vmatpush1.msra.mxu0 %v33
  %55 = vmatprep.subr.mxu0 0.0
  %56 = vmatpush1.msra.mxu0 %v32
  %57 = vmatprep.subr.mxu0 0.0
  %58 = vmatpush1.msra.mxu0 %v31
  %59 = vmatprep.subr.mxu0 0.0
  %60 = vmatpush1.msra.mxu0 %v30
  %61 = vmatprep.subr.mxu0 0.0
  %62 = vmatpush1.msra.mxu0 %v29
  %63 = vmatprep.subr.mxu0 0.0
  %64 = vmatpush1.msra.mxu0 %v28
  %65 = vmatprep.subr.mxu0 0.0
  %66 = vmatpush1.msra.mxu0 %v27
  %67 = vmatprep.subr.mxu0 0.0
  %68 = vmatpush1.msra.mxu0 %v26
  %69 = vmatprep.subr.mxu0 0.0
  %70 = vmatpush1.msra.mxu0 %v25
  %71 = vmatprep.subr.mxu0 0.0
  %72 = vmatpush1.msra.mxu0 %v24
  %73 = vmatprep.subr.mxu0 0.0
  %74 = vmatpush1.msra.mxu0 %v23
  %75 = vmatprep.subr.mxu0 0.0
  %76 = vmatpush1.msra.mxu0 %v22
  %77 = vmatprep.subr.mxu0 0.0
  %78 = vmatpush2.msra.mxu0 0.0
  %79 = vmatprep.subr.mxu0 0.0
  %80 = vmatpush2.msra.mxu0 0.0
  %81 = vmatprep.subr.mxu0 0.0
  %82 = vmatpush2.msra.mxu0 0.0
  %83 = vmatprep.subr.mxu0 0.0
  %84 = vmatpush2.msra.mxu0 0.0
  %85 = vmatprep.subr.mxu0 0.0
  %86 = vmatpush2.msra.mxu0 0.0
  %87 = vmatprep.subr.mxu0 0.0
  %88 = vmatpush2.msra.mxu0 0.0
  %89 = vmatprep.subr.mxu0 0.0
  %90 = vmatpush2.msra.mxu0 0.0
  %91 = vmatprep.subr.mxu0 0.0
  %92 = vmatpush2.msra.mxu0 0.0
  %93 = vmatprep.subr.mxu0 0.0
  %94 = vmatpush2.msra.mxu0 0.0
  %95 = vmatprep.subr.mxu0 0.0
  %96 = vmatpush2.msra.mxu0 0.0
  %97 = vmatprep.subr.mxu0 0.0
  %98 = vmatpush2.msra.mxu0 0.0
  %99 = vmatprep.subr.mxu0 0.0
  %100 = vmatpush2.msra.mxu0 0.0
  %101 = vmatprep.subr.mxu0 0.0
  %102 = vmatpush2.msra.mxu0 0.0
  %103 = vmatprep.subr.mxu0 0.0
  %104 = vmatpush2.msra.mxu0 0.0
  %105 = vmatprep.subr.mxu0 0.0
  %106 = vmatpush2.msra.mxu0 0.0
  %107 = vmatprep.subr.mxu0 0.0
  %108 = vmatpush2.msra.mxu0 0.0
  %109 = vmatprep.mubr.f32.mxu0 0.0
  %110 = vmatmul.mubr.f32.gmra.mxu0 %v14
  %v111 = vpop.f32.mrf.mxu0
  %v112 = vadd.f32 %v43, %v111
  %v113 = vpop.f32.mrf.mxu0
  %114 = vmatprep.mubr.f32.mxu0 0.0
  %115 = vmatmul.mubr.f32.gmra.mxu0 %v15
  %v116 = vpop.f32.mrf.mxu0
  %v117 = vadd.f32 %v43, %v116
  %v118 = vpop.f32.mrf.mxu0
  %119 = vmatprep.mubr.f32.mxu0 0.0
  %120 = vmatmul.mubr.f32.gmra.mxu0 %v16
  %v121 = vpop.f32.mrf.mxu0
  %v122 = vadd.f32 %v43, %v121
  %v123 = vpop.f32.mrf.mxu0
  %124 = vmatprep.mubr.f32.mxu0 0.0
  %125 = vmatmul.mubr.f32.gmra.mxu0 %v17
  %v126 = vpop.f32.mrf.mxu0
  %v127 = vadd.f32 %v43, %v126
  %v128 = vpop.f32.mrf.mxu0
  %129 = vmatprep.mubr.f32.mxu0 0.0
  %130 = vmatmul.mubr.f32.gmra.mxu0 %v18
  %v131 = vpop.f32.mrf.mxu0
  %v132 = vadd.f32 %v43, %v131
  %v133 = vpop.f32.mrf.mxu0
  %134 = vmatprep.mubr.f32.mxu0 0.0
  %135 = vmatmul.mubr.f32.gmra.mxu0 %v19
  %v136 = vpop.f32.mrf.mxu0
  %v137 = vadd.f32 %v43, %v136
  %v138 = vpop.f32.mrf.mxu0
  %139 = vmatprep.mubr.f32.mxu0 0.0
  %140 = vmatmul.mubr.f32.gmra.mxu0 %v20
  %v141 = vpop.f32.mrf.mxu0
  %v142 = vadd.f32 %v43, %v141
  %v143 = vpop.f32.mrf.mxu0
  %144 = vmatprep.mubr.f32.mxu0 0.0
  %145 = vmatmul.mubr.f32.gmra.mxu0 %v21
  %v146 = vpop.f32.mrf.mxu0
  %v147 = vadd.f32 %v43, %v146
  %v148 = vpop.f32.mrf.mxu0
  %149 = vdwg.mxu0
  %150 = vst [vmem:[%s3] sm:$0xff] %v112
  %151 = vst [vmem:[%s3 + $0x8] sm:$0xff] %v117
  %152 = vst [vmem:[%s3 + $0x10] sm:$0xff] %v122
  %153 = vst [vmem:[%s3 + $0x18] sm:$0xff] %v127
  %154 = vst [vmem:[%s3 + $0x20] sm:$0xff] %v132
  %155 = vst [vmem:[%s3 + $0x28] sm:$0xff] %v137
  %156 = vst [vmem:[%s3 + $0x30] sm:$0xff] %v142
  %157 = vst [vmem:[%s3 + $0x38] sm:$0xff] %v147
  // Predicated region
  $region14: #{lyrics_midi_lstm_forward.5} parent=0 // pred_check
    _
  $region15: #{lyrics_midi_lstm_forward.5} parent=0 // pred_check_branch
    %159 = sbr.rel (0) target = $region17
  $region16: #{lyrics_midi_lstm_forward.5} parent=0 // pred_region
    _
  $region17: #{lyrics_midi_lstm_forward.5} parent=0 // pred_fallthru
    _
  // Predicated region
  $region18: #{lyrics_midi_lstm_forward.5} parent=0 // pred_check
    _
  $region19: #{lyrics_midi_lstm_forward.5} parent=0 // pred_check_branch
    %161 = sbr.rel (0) target = $region21
  $region20: #{lyrics_midi_lstm_forward.5} parent=0 // pred_region
    _
  $region21: #{lyrics_midi_lstm_forward.5} parent=0 // pred_fallthru
    _

// kernel: lyrics_midi_lstm_forward.3
$region0: #{lyrics_midi_lstm_forward.3}
  #allocation0 [shape = 'u32[]', space=smem, size = 0x4, offset = 0x4, fixed_abs, tag = 'smem constant byte address 0x4 - core index']
  #allocation1 [shape = 'u32[144,128]{1,0:T(1,128)}', space=vmem, size = 0x12000, scoped, tag = 'internal scratch']
  %s0 = inlined_call_operand.vmem [shape: f32[64,8], index: 0, kind: input, shape index: {}]
  %s1 = inlined_call_operand.vmem [shape: f32[8,512], index: 1, kind: input, shape index: {}]
  %s2 = inlined_call_operand.vmem [shape: f32[1,512], index: 2, kind: input, shape index: {}]
  %s3 = inlined_call_operand.vmem [shape: f32[64,512], index: 3, kind: output, shape index: {}]
  %s4 = sld [smem:[#allocation0]]
  $region22: #{lyrics_midi_lstm_forward.3} parent=0
    _
  %s6 = ssub.s32 1, %s4
  %s7 = scalar_select 0, %s6, %s4
  // Predicated region
  $region2: #{lyrics_midi_lstm_forward.3} parent=0 // pred_check
    _
  $region3: #{lyrics_midi_lstm_forward.3} parent=0 // pred_check_branch
    %9 = sbr.rel (0) target = $region5
  $region4: #{lyrics_midi_lstm_forward.3} parent=0 // pred_region
    _
  $region5: #{lyrics_midi_lstm_forward.3} parent=0 // pred_fallthru
    _
  // Predicated region
  $region6: #{lyrics_midi_lstm_forward.3} parent=0 // pred_check
    _
  $region7: #{lyrics_midi_lstm_forward.3} parent=0 // pred_check_branch
    %11 = sbr.rel (0) target = $region9
  $region8: #{lyrics_midi_lstm_forward.3} parent=0 // pred_region
    _
  $region9: #{lyrics_midi_lstm_forward.3} parent=0 // pred_fallthru
    _
  // Predicated region
  $region10: #{lyrics_midi_lstm_forward.3} parent=0 // pred_check
    _
  $region11: #{lyrics_midi_lstm_forward.3} parent=0 // pred_check_branch
    %13 = sbr.rel (0) target = $region13
  $region12: #{lyrics_midi_lstm_forward.3} parent=0 // pred_region
    _
  $region13: #{lyrics_midi_lstm_forward.3} parent=0 // pred_fallthru
    _
  %v14 = vld [vmem:[%s0] sm:$0xff]
  %v15 = vld [vmem:[%s0 + $0x8] sm:$0xff]
  %v16 = vld [vmem:[%s0 + $0x10] sm:$0xff]
  %v17 = vld [vmem:[%s0 + $0x18] sm:$0xff]
  %v18 = vld [vmem:[%s0 + $0x20] sm:$0xff]
  %v19 = vld [vmem:[%s0 + $0x28] sm:$0xff]
  %v20 = vld [vmem:[%s0 + $0x30] sm:$0xff]
  %v21 = vld [vmem:[%s0 + $0x38] sm:$0xff]
  %v22 = vld [vmem:[%s1] sm:$0xff]
  %v23 = vld [vmem:[%s1 + $0x8] sm:$0xff]
  %v24 = vld [vmem:[%s1 + $0x10] sm:$0xff]
  %v25 = vld [vmem:[%s1 + $0x18] sm:$0xff]
  %v26 = vld [vmem:[%s2] sm:$0xf]
  %v28 = vlaneseq
  %v29 = vshrl.u32 %v28, 7
  %v30 = vsub.s32 0, %v29
  %v31 = vrot.slane %v26, %v30
  %v32 = vlaneseq
  %v33 = vshrl.u32 %v32, 7
  %v34 = vsub.s32 1, %v33
  %v35 = vrot.slane %v26, %v34
  %v36 = vlaneseq
  %v37 = vshrl.u32 %v36, 7
  %v38 = vsub.s32 2, %v37
  %v39 = vrot.slane %v26, %v38
  %v40 = vlaneseq
  %v41 = vshrl.u32 %v40, 7
  %v42 = vsub.s32 3, %v41
  %v43 = vrot.slane %v26, %v42
  %vm48 = vcmask 64512
  %v50 = vsel %vm48, %v14, 0
  %v53 = vsel %vm48, %v15, 0
  %v56 = vsel %vm48, %v16, 0
  %v59 = vsel %vm48, %v17, 0
  %v62 = vsel %vm48, %v18, 0
  %v65 = vsel %vm48, %v19, 0
  %v68 = vsel %vm48, %v20, 0
  %v71 = vsel %vm48, %v21, 0
  %73 = vmatprep.subr.mxu0 0.0
  %74 = vmatpush1.msra.mxu0 0.0
  %75 = vmatprep.subr.mxu0 0.0
  %76 = vmatpush1.msra.mxu0 0.0
  %77 = vmatprep.subr.mxu0 0.0
  %78 = vmatpush1.msra.mxu0 0.0
  %79 = vmatprep.subr.mxu0 0.0
  %80 = vmatpush1.msra.mxu0 0.0
  %81 = vmatprep.subr.mxu0 0.0
  %82 = vmatpush1.msra.mxu0 0.0
  %83 = vmatprep.subr.mxu0 0.0
  %84 = vmatpush1.msra.mxu0 0.0
  %85 = vmatprep.subr.mxu0 0.0
  %86 = vmatpush1.msra.mxu0 0.0
  %87 = vmatprep.subr.mxu0 0.0
  %88 = vmatpush1.msra.mxu0 0.0
  %89 = vmatprep.subr.mxu0 0.0
  %90 = vmatpush1.msra.mxu0 0.0
  %91 = vmatprep.subr.mxu0 0.0
  %92 = vmatpush1.msra.mxu0 0.0
  %93 = vmatprep.subr.mxu0 0.0
  %94 = vmatpush1.msra.mxu0 0.0
  %95 = vmatprep.subr.mxu0 0.0
  %96 = vmatpush1.msra.mxu0 0.0
  %97 = vmatprep.subr.mxu0 0.0
  %98 = vmatpush1.msra.mxu0 0.0
  %99 = vmatprep.subr.mxu0 0.0
  %100 = vmatpush1.msra.mxu0 0.0
  %101 = vmatprep.subr.mxu0 0.0
  %102 = vmatpush1.msra.mxu0 0.0
  %103 = vmatprep.subr.mxu0 %v23
  %104 = vmatpush1.msra.mxu0 %v22
  %105 = vmatprep.subr.mxu0 0.0
  %106 = vmatpush2.msra.mxu0 0.0
  %107 = vmatprep.subr.mxu0 0.0
  %108 = vmatpush2.msra.mxu0 0.0
  %109 = vmatprep.subr.mxu0 0.0
  %110 = vmatpush2.msra.mxu0 0.0
  %111 = vmatprep.subr.mxu0 0.0
  %112 = vmatpush2.msra.mxu0 0.0
  %113 = vmatprep.subr.mxu0 0.0
  %114 = vmatpush2.msra.mxu0 0.0
  %115 = vmatprep.subr.mxu0 0.0
  %116 = vmatpush2.msra.mxu0 0.0
  %117 = vmatprep.subr.mxu0 0.0
  %118 = vmatpush2.msra.mxu0 0.0
  %119 = vmatprep.subr.mxu0 0.0
  %120 = vmatpush2.msra.mxu0 0.0
  %121 = vmatprep.subr.mxu0 0.0
  %122 = vmatpush2.msra.mxu0 0.0
  %123 = vmatprep.subr.mxu0 0.0
  %124 = vmatpush2.msra.mxu0 0.0
  %125 = vmatprep.subr.mxu0 0.0
  %126 = vmatpush2.msra.mxu0 0.0
  %127 = vmatprep.subr.mxu0 0.0
  %128 = vmatpush2.msra.mxu0 0.0
  %129 = vmatprep.subr.mxu0 0.0
  %130 = vmatpush2.msra.mxu0 0.0
  %131 = vmatprep.subr.mxu0 0.0
  %132 = vmatpush2.msra.mxu0 0.0
  %133 = vmatprep.subr.mxu0 0.0
  %134 = vmatpush2.msra.mxu0 0.0
  %135 = vmatprep.subr.mxu0 0.0
  %136 = vmatpush2.msra.mxu0 0.0
  %137 = vmatprep.mubr.f32.mxu0 0.0
  %138 = vmatmul.mubr.f32.gmra.mxu0 %v50
  %v139 = vpop.f32.mrf.mxu0
  %v140 = vadd.f32 %v31, %v139
  %v141 = vpop.f32.mrf.mxu0
  %v142 = vadd.f32 %v35, %v141
  %143 = vmatprep.mubr.f32.mxu0 0.0
  %144 = vmatmul.mubr.f32.gmra.mxu0 %v53
  %v145 = vpop.f32.mrf.mxu0
  %v146 = vadd.f32 %v31, %v145
  %v147 = vpop.f32.mrf.mxu0
  %v148 = vadd.f32 %v35, %v147
  %149 = vmatprep.mubr.f32.mxu0 0.0
  %150 = vmatmul.mubr.f32.gmra.mxu0 %v56
  %v151 = vpop.f32.mrf.mxu0
  %v152 = vadd.f32 %v31, %v151
  %v153 = vpop.f32.mrf.mxu0
  %v154 = vadd.f32 %v35, %v153
  %155 = vmatprep.mubr.f32.mxu0 0.0
  %156 = vmatmul.mubr.f32.gmra.mxu0 %v59
  %v157 = vpop.f32.mrf.mxu0
  %v158 = vadd.f32 %v31, %v157
  %v159 = vpop.f32.mrf.mxu0
  %v160 = vadd.f32 %v35, %v159
  %161 = vmatprep.mubr.f32.mxu0 0.0
  %162 = vmatmul.mubr.f32.gmra.mxu0 %v62
  %v163 = vpop.f32.mrf.mxu0
  %v164 = vadd.f32 %v31, %v163
  %v165 = vpop.f32.mrf.mxu0
  %v166 = vadd.f32 %v35, %v165
  %167 = vmatprep.mubr.f32.mxu0 0.0
  %168 = vmatmul.mubr.f32.gmra.mxu0 %v65
  %v169 = vpop.f32.mrf.mxu0
  %v170 = vadd.f32 %v31, %v169
  %v171 = vpop.f32.mrf.mxu0
  %v172 = vadd.f32 %v35, %v171
  %173 = vmatprep.mubr.f32.mxu0 0.0
  %174 = vmatmul.mubr.f32.gmra.mxu0 %v68
  %v175 = vpop.f32.mrf.mxu0
  %v176 = vadd.f32 %v31, %v175
  %v177 = vpop.f32.mrf.mxu0
  %v178 = vadd.f32 %v35, %v177
  %179 = vmatprep.mubr.f32.mxu0 0.0
  %180 = vmatmul.mubr.f32.gmra.mxu0 %v71
  %v181 = vpop.f32.mrf.mxu0
  %v182 = vadd.f32 %v31, %v181
  %v183 = vpop.f32.mrf.mxu0
  %v184 = vadd.f32 %v35, %v183
  %185 = vdwg.mxu0
  %186 = vmatprep.subr.mxu0 0.0
  %187 = vmatpush1.msra.mxu0 0.0
  %188 = vmatprep.subr.mxu0 0.0
  %189 = vmatpush1.msra.mxu0 0.0
  %190 = vmatprep.subr.mxu0 0.0
  %191 = vmatpush1.msra.mxu0 0.0
  %192 = vmatprep.subr.mxu0 0.0
  %193 = vmatpush1.msra.mxu0 0.0
  %194 = vmatprep.subr.mxu0 0.0
  %195 = vmatpush1.msra.mxu0 0.0
  %196 = vmatprep.subr.mxu0 0.0
  %197 = vmatpush1.msra.mxu0 0.0
  %198 = vmatprep.subr.mxu0 0.0
  %199 = vmatpush1.msra.mxu0 0.0
  %200 = vmatprep.subr.mxu0 0.0
  %201 = vmatpush1.msra.mxu0 0.0
  %202 = vmatprep.subr.mxu0 0.0
  %203 = vmatpush1.msra.mxu0 0.0
  %204 = vmatprep.subr.mxu0 0.0
  %205 = vmatpush1.msra.mxu0 0.0
  %206 = vmatprep.subr.mxu0 0.0
  %207 = vmatpush1.msra.mxu0 0.0
  %208 = vmatprep.subr.mxu0 0.0
  %209 = vmatpush1.msra.mxu0 0.0
  %210 = vmatprep.subr.mxu0 0.0
  %211 = vmatpush1.msra.mxu0 0.0
  %212 = vmatprep.subr.mxu0 0.0
  %213 = vmatpush1.msra.mxu0 0.0
  %214 = vmatprep.subr.mxu0 0.0
  %215 = vmatpush1.msra.mxu0 0.0
  %216 = vmatprep.subr.mxu0 %v25
  %217 = vmatpush1.msra.mxu0 %v24
  %218 = vmatprep.subr.mxu0 0.0
  %219 = vmatpush2.msra.mxu0 0.0
  %220 = vmatprep.subr.mxu0 0.0
  %221 = vmatpush2.msra.mxu0 0.0
  %222 = vmatprep.subr.mxu0 0.0
  %223 = vmatpush2.msra.mxu0 0.0
  %224 = vmatprep.subr.mxu0 0.0
  %225 = vmatpush2.msra.mxu0 0.0
  %226 = vmatprep.subr.mxu0 0.0
  %227 = vmatpush2.msra.mxu0 0.0
  %228 = vmatprep.subr.mxu0 0.0
  %229 = vmatpush2.msra.mxu0 0.0
  %230 = vmatprep.subr.mxu0 0.0
  %231 = vmatpush2.msra.mxu0 0.0
  %232 = vmatprep.subr.mxu0 0.0
  %233 = vmatpush2.msra.mxu0 0.0
  %234 = vmatprep.subr.mxu0 0.0
  %235 = vmatpush2.msra.mxu0 0.0
  %236 = vmatprep.subr.mxu0 0.0
  %237 = vmatpush2.msra.mxu0 0.0
  %238 = vmatprep.subr.mxu0 0.0
  %239 = vmatpush2.msra.mxu0 0.0
  %240 = vmatprep.subr.mxu0 0.0
  %241 = vmatpush2.msra.mxu0 0.0
  %242 = vmatprep.subr.mxu0 0.0
  %243 = vmatpush2.msra.mxu0 0.0
  %244 = vmatprep.subr.mxu0 0.0
  %245 = vmatpush2.msra.mxu0 0.0
  %246 = vmatprep.subr.mxu0 0.0
  %247 = vmatpush2.msra.mxu0 0.0
  %248 = vmatprep.subr.mxu0 0.0
  %249 = vmatpush2.msra.mxu0 0.0
  %250 = vmatprep.mubr.f32.mxu0 0.0
  %251 = vmatmul.mubr.f32.gmra.mxu0 %v50
  %v252 = vpop.f32.mrf.mxu0
  %v253 = vadd.f32 %v39, %v252
  %v254 = vpop.f32.mrf.mxu0
  %v255 = vadd.f32 %v43, %v254
  %256 = vmatprep.mubr.f32.mxu0 0.0
  %257 = vmatmul.mubr.f32.gmra.mxu0 %v53
  %v258 = vpop.f32.mrf.mxu0
  %v259 = vadd.f32 %v39, %v258
  %v260 = vpop.f32.mrf.mxu0
  %v261 = vadd.f32 %v43, %v260
  %262 = vmatprep.mubr.f32.mxu0 0.0
  %263 = vmatmul.mubr.f32.gmra.mxu0 %v56
  %v264 = vpop.f32.mrf.mxu0
  %v265 = vadd.f32 %v39, %v264
  %v266 = vpop.f32.mrf.mxu0
  %v267 = vadd.f32 %v43, %v266
  %268 = vmatprep.mubr.f32.mxu0 0.0
  %269 = vmatmul.mubr.f32.gmra.mxu0 %v59
  %v270 = vpop.f32.mrf.mxu0
  %v271 = vadd.f32 %v39, %v270
  %v272 = vpop.f32.mrf.mxu0
  %v273 = vadd.f32 %v43, %v272
  %274 = vmatprep.mubr.f32.mxu0 0.0
  %275 = vmatmul.mubr.f32.gmra.mxu0 %v62
  %v276 = vpop.f32.mrf.mxu0
  %v277 = vadd.f32 %v39, %v276
  %v278 = vpop.f32.mrf.mxu0
  %v279 = vadd.f32 %v43, %v278
  %280 = vmatprep.mubr.f32.mxu0 0.0
  %281 = vmatmul.mubr.f32.gmra.mxu0 %v65
  %v282 = vpop.f32.mrf.mxu0
  %v283 = vadd.f32 %v39, %v282
  %v284 = vpop.f32.mrf.mxu0
  %v285 = vadd.f32 %v43, %v284
  %286 = vmatprep.mubr.f32.mxu0 0.0
  %287 = vmatmul.mubr.f32.gmra.mxu0 %v68
  %v288 = vpop.f32.mrf.mxu0
  %v289 = vadd.f32 %v39, %v288
  %v290 = vpop.f32.mrf.mxu0
  %v291 = vadd.f32 %v43, %v290
  %292 = vmatprep.mubr.f32.mxu0 0.0
  %293 = vmatmul.mubr.f32.gmra.mxu0 %v71
  %v294 = vpop.f32.mrf.mxu0
  %v295 = vadd.f32 %v39, %v294
  %v296 = vpop.f32.mrf.mxu0
  %v297 = vadd.f32 %v43, %v296
  %298 = vdwg.mxu0
  %299 = vst [vmem:[%s3] sm:$0xff] %v140
  %300 = vst [vmem:[%s3 + $0x8] sm:$0xff] %v142
  %301 = vst [vmem:[%s3 + $0x10] sm:$0xff] %v253
  %302 = vst [vmem:[%s3 + $0x18] sm:$0xff] %v255
  %303 = vst [vmem:[%s3 + $0x20] sm:$0xff] %v146
  %304 = vst [vmem:[%s3 + $0x28] sm:$0xff] %v148
  %305 = vst [vmem:[%s3 + $0x30] sm:$0xff] %v259
  %306 = vst [vmem:[%s3 + $0x38] sm:$0xff] %v261
  %307 = vst [vmem:[%s3 + $0x40] sm:$0xff] %v152
  %308 = vst [vmem:[%s3 + $0x48] sm:$0xff] %v154
  %309 = vst [vmem:[%s3 + $0x50] sm:$0xff] %v265
  %310 = vst [vmem:[%s3 + $0x58] sm:$0xff] %v267
  %311 = vst [vmem:[%s3 + $0x60] sm:$0xff] %v158
  %312 = vst [vmem:[%s3 + $0x68] sm:$0xff] %v160
  %313 = vst [vmem:[%s3 + $0x70] sm:$0xff] %v271
  %314 = vst [vmem:[%s3 + $0x78] sm:$0xff] %v273
  %315 = vst [vmem:[%s3 + $0x80] sm:$0xff] %v164
  %316 = vst [vmem:[%s3 + $0x88] sm:$0xff] %v166
  %317 = vst [vmem:[%s3 + $0x90] sm:$0xff] %v277
  %318 = vst [vmem:[%s3 + $0x98] sm:$0xff] %v279
  %319 = vst [vmem:[%s3 + $0xa0] sm:$0xff] %v170
  %320 = vst [vmem:[%s3 + $0xa8] sm:$0xff] %v172
  %321 = vst [vmem:[%s3 + $0xb0] sm:$0xff] %v283
  %322 = vst [vmem:[%s3 + $0xb8] sm:$0xff] %v285
  %323 = vst [vmem:[%s3 + $0xc0] sm:$0xff] %v176
  %324 = vst [vmem:[%s3 + $0xc8] sm:$0xff] %v178
  %325 = vst [vmem:[%s3 + $0xd0] sm:$0xff] %v289
  %326 = vst [vmem:[%s3 + $0xd8] sm:$0xff] %v291
  %327 = vst [vmem:[%s3 + $0xe0] sm:$0xff] %v182
  %328 = vst [vmem:[%s3 + $0xe8] sm:$0xff] %v184
  %329 = vst [vmem:[%s3 + $0xf0] sm:$0xff] %v295
  %330 = vst [vmem:[%s3 + $0xf8] sm:$0xff] %v297
  // Predicated region
  $region14: #{lyrics_midi_lstm_forward.3} parent=0 // pred_check
    _
  $region15: #{lyrics_midi_lstm_forward.3} parent=0 // pred_check_branch
    %332 = sbr.rel (0) target = $region17
  $region16: #{lyrics_midi_lstm_forward.3} parent=0 // pred_region
    _
  $region17: #{lyrics_midi_lstm_forward.3} parent=0 // pred_fallthru
    _
  // Predicated region
  $region18: #{lyrics_midi_lstm_forward.3} parent=0 // pred_check
    _
  $region19: #{lyrics_midi_lstm_forward.3} parent=0 // pred_check_branch
    %334 = sbr.rel (0) target = $region21
  $region20: #{lyrics_midi_lstm_forward.3} parent=0 // pred_region
    _
  $region21: #{lyrics_midi_lstm_forward.3} parent=0 // pred_fallthru
    _

// kernel: lyrics_midi_lstm_forward.4
$region0: #{lyrics_midi_lstm_forward.4}
  #allocation0 [shape = 'u32[]', space=smem, size = 0x4, offset = 0x4, fixed_abs, tag = 'smem constant byte address 0x4 - core index']
  #allocation1 [shape = 'u32[144,128]{1,0:T(1,128)}', space=vmem, size = 0x12000, scoped, tag = 'internal scratch']
  %s0 = inlined_call_operand.vmem [shape: f32[8,8,512], index: 0, kind: input, shape index: {}]
  %s1 = inlined_call_operand.vmem [shape: f32[128,512], index: 1, kind: input, shape index: {}]
  %s2 = inlined_call_operand.vmem [shape: f32[8,128], index: 2, kind: input, shape index: {}, may-alias: {2,3}]
  %s3 = inlined_call_operand.vmem [shape: f32[8,128], index: 3, kind: input, shape index: {}, may-alias: {2,3}]
  %s4 = inlined_call_operand.vmem [shape: f32[8,8,128], index: 4, kind: output, shape index: {0}]
  %s5 = inlined_call_operand.vmem [shape: f32[8,128], index: 5, kind: output, shape index: {1}]
  %s6 = inlined_call_operand.vmem [shape: f32[8,128], index: 6, kind: output, shape index: {2}]
  %7 = xla_tuple %s4, %s5, %s6
  %s8 = sld [smem:[#allocation0]]
  $region46: #{lyrics_midi_lstm_forward.4} parent=0
    _
  %s10 = ssub.s32 1, %s8
  %s11 = scalar_select 0, %s10, %s8
  // Predicated region
  $region2: #{lyrics_midi_lstm_forward.4} parent=0 // pred_check
    _
  $region3: #{lyrics_midi_lstm_forward.4} parent=0 // pred_check_branch
    %13 = sbr.rel (0) target = $region5
  $region4: #{lyrics_midi_lstm_forward.4} parent=0 // pred_region
    _
  $region5: #{lyrics_midi_lstm_forward.4} parent=0 // pred_fallthru
    _
  // Predicated region
  $region6: #{lyrics_midi_lstm_forward.4} parent=0 // pred_check
    _
  $region7: #{lyrics_midi_lstm_forward.4} parent=0 // pred_check_branch
    %15 = sbr.rel (0) target = $region9
  $region8: #{lyrics_midi_lstm_forward.4} parent=0 // pred_region
    _
  $region9: #{lyrics_midi_lstm_forward.4} parent=0 // pred_fallthru
    _
  // Predicated region
  $region10: #{lyrics_midi_lstm_forward.4} parent=0 // pred_check
    _
  $region11: #{lyrics_midi_lstm_forward.4} parent=0 // pred_check_branch
    %17 = sbr.rel (0) target = $region13
  $region12: #{lyrics_midi_lstm_forward.4} parent=0 // pred_region
    _
  $region13: #{lyrics_midi_lstm_forward.4} parent=0 // pred_fallthru
    _
  // Predicated region
  $region14: #{lyrics_midi_lstm_forward.4} parent=0 // pred_check
    _
  $region15: #{lyrics_midi_lstm_forward.4} parent=0 // pred_check_branch
    %19 = sbr.rel (0) target = $region17
  $region16: #{lyrics_midi_lstm_forward.4} parent=0 // pred_region
    _
  $region17: #{lyrics_midi_lstm_forward.4} parent=0 // pred_fallthru
    _
  %p20 = scmp.eq.s32.totalorder 0, 0
  // Predicated region
  $region18: #{lyrics_midi_lstm_forward.4} parent=0 // pred_check
    %p21 = pneg %p20
  $region19: #{lyrics_midi_lstm_forward.4} parent=0 // pred_check_branch
    %23 = sbr.rel (%p21) target = $region21
  $region20: #{lyrics_midi_lstm_forward.4} parent=0 // pred_region
    %v24 = vld [vmem:[%s2] sm:$0xff]
    %25 = vst [vmem:[%s5] sm:$0xff] %v24
    %v26 = vld [vmem:[%s3] sm:$0xff]
    %27 = vst [vmem:[%s6] sm:$0xff] %v26
  $region21: #{lyrics_midi_lstm_forward.4} parent=0 // pred_fallthru
    _
  %v28 = vld [vmem:[%s1] sm:$0xff]
  %v29 = vld [vmem:[%s1 + $0x8] sm:$0xff]
  %v30 = vld [vmem:[%s1 + $0x10] sm:$0xff]
  %v31 = vld [vmem:[%s1 + $0x18] sm:$0xff]
  %v32 = vld [vmem:[%s1 + $0x20] sm:$0xff]
  %v33 = vld [vmem:[%s1 + $0x28] sm:$0xff]
  %v34 = vld [vmem:[%s1 + $0x30] sm:$0xff]
  %v35 = vld [vmem:[%s1 + $0x38] sm:$0xff]
  %v36 = vld [vmem:[%s1 + $0x40] sm:$0xff]
  %v37 = vld [vmem:[%s1 + $0x48] sm:$0xff]
  %v38 = vld [vmem:[%s1 + $0x50] sm:$0xff]
  %v39 = vld [vmem:[%s1 + $0x58] sm:$0xff]
  %v40 = vld [vmem:[%s1 + $0x60] sm:$0xff]
  %v41 = vld [vmem:[%s1 + $0x68] sm:$0xff]
  %v42 = vld [vmem:[%s1 + $0x70] sm:$0xff]
  %v43 = vld [vmem:[%s1 + $0x78] sm:$0xff]
  %v44 = vld [vmem:[%s1 + $0x80] sm:$0xff]
  %v45 = vld [vmem:[%s1 + $0x88] sm:$0xff]
  %v46 = vld [vmem:[%s1 + $0x90] sm:$0xff]
  %v47 = vld [vmem:[%s1 + $0x98] sm:$0xff]
  %v48 = vld [vmem:[%s1 + $0xa0] sm:$0xff]
  %v49 = vld [vmem:[%s1 + $0xa8] sm:$0xff]
  %v50 = vld [vmem:[%s1 + $0xb0] sm:$0xff]
  %v51 = vld [vmem:[%s1 + $0xb8] sm:$0xff]
  %v52 = vld [vmem:[%s1 + $0xc0] sm:$0xff]
  %v53 = vld [vmem:[%s1 + $0xc8] sm:$0xff]
  %v54 = vld [vmem:[%s1 + $0xd0] sm:$0xff]
  %v55 = vld [vmem:[%s1 + $0xd8] sm:$0xff]
  %v56 = vld [vmem:[%s1 + $0xe0] sm:$0xff]
  %v57 = vld [vmem:[%s1 + $0xe8] sm:$0xff]
  %v58 = vld [vmem:[%s1 + $0xf0] sm:$0xff]
  %v59 = vld [vmem:[%s1 + $0xf8] sm:$0xff]
  %v60 = vld [vmem:[%s1 + $0x100] sm:$0xff]
  %v61 = vld [vmem:[%s1 + $0x108] sm:$0xff]
  %v62 = vld [vmem:[%s1 + $0x110] sm:$0xff]
  %v63 = vld [vmem:[%s1 + $0x118] sm:$0xff]
  %v64 = vld [vmem:[%s1 + $0x120] sm:$0xff]
  %v65 = vld [vmem:[%s1 + $0x128] sm:$0xff]
  %v66 = vld [vmem:[%s1 + $0x130] sm:$0xff]
  %v67 = vld [vmem:[%s1 + $0x138] sm:$0xff]
  %v68 = vld [vmem:[%s1 + $0x140] sm:$0xff]
  %v69 = vld [vmem:[%s1 + $0x148] sm:$0xff]
  %v70 = vld [vmem:[%s1 + $0x150] sm:$0xff]
  %v71 = vld [vmem:[%s1 + $0x158] sm:$0xff]
  %v72 = vld [vmem:[%s1 + $0x160] sm:$0xff]
  %v73 = vld [vmem:[%s1 + $0x168] sm:$0xff]
  %v74 = vld [vmem:[%s1 + $0x170] sm:$0xff]
  %v75 = vld [vmem:[%s1 + $0x178] sm:$0xff]
  %v76 = vld [vmem:[%s1 + $0x180] sm:$0xff]
  %v77 = vld [vmem:[%s1 + $0x188] sm:$0xff]
  %v78 = vld [vmem:[%s1 + $0x190] sm:$0xff]
  %v79 = vld [vmem:[%s1 + $0x198] sm:$0xff]
  %v80 = vld [vmem:[%s1 + $0x1a0] sm:$0xff]
  %v81 = vld [vmem:[%s1 + $0x1a8] sm:$0xff]
  %v82 = vld [vmem:[%s1 + $0x1b0] sm:$0xff]
  %v83 = vld [vmem:[%s1 + $0x1b8] sm:$0xff]
  %v84 = vld [vmem:[%s1 + $0x1c0] sm:$0xff]
  %v85 = vld [vmem:[%s1 + $0x1c8] sm:$0xff]
  %v86 = vld [vmem:[%s1 + $0x1d0] sm:$0xff]
  %v87 = vld [vmem:[%s1 + $0x1d8] sm:$0xff]
  %v88 = vld [vmem:[%s1 + $0x1e0] sm:$0xff]
  %v89 = vld [vmem:[%s1 + $0x1e8] sm:$0xff]
  %v90 = vld [vmem:[%s1 + $0x1f0] sm:$0xff]
  %v91 = vld [vmem:[%s1 + $0x1f8] sm:$0xff]
  %v92 = vld [vmem:[%s5] sm:$0xff]
  %v93 = vld [vmem:[%s6] sm:$0xff]
  %v94 = vld [vmem:[%s0] sm:$0xff]
  %v95 = vld [vmem:[%s0 + $0x8] sm:$0xff]
  %v96 = vld [vmem:[%s0 + $0x10] sm:$0xff]
  %v97 = vld [vmem:[%s0 + $0x18] sm:$0xff]
  %98 = vmatprep.subr.mxu0 %v89
  %99 = vmatpush1.msra.mxu0 %v88
  %100 = vmatprep.subr.mxu0 %v85
  %101 = vmatpush1.msra.mxu0 %v84
  %102 = vmatprep.subr.mxu0 %v81
  %103 = vmatpush1.msra.mxu0 %v80
  %104 = vmatprep.subr.mxu0 %v77
  %105 = vmatpush1.msra.mxu0 %v76
  %106 = vmatprep.subr.mxu0 %v73
  %107 = vmatpush1.msra.mxu0 %v72
  %108 = vmatprep.subr.mxu0 %v69
  %109 = vmatpush1.msra.mxu0 %v68
  %110 = vmatprep.subr.mxu0 %v65
  %111 = vmatpush1.msra.mxu0 %v64
  %112 = vmatprep.subr.mxu0 %v61
  %113 = vmatpush1.msra.mxu0 %v60
  %114 = vmatprep.subr.mxu0 %v57
  %115 = vmatpush1.msra.mxu0 %v56
  %116 = vmatprep.subr.mxu0 %v53
  %117 = vmatpush1.msra.mxu0 %v52
  %118 = vmatprep.subr.mxu0 %v49
  %119 = vmatpush1.msra.mxu0 %v48
  %120 = vmatprep.subr.mxu0 %v45
  %121 = vmatpush1.msra.mxu0 %v44
  %122 = vmatprep.subr.mxu0 %v41
  %123 = vmatpush1.msra.mxu0 %v40
  %124 = vmatprep.subr.mxu0 %v37
  %125 = vmatpush1.msra.mxu0 %v36
  %126 = vmatprep.subr.mxu0 %v33
  %127 = vmatpush1.msra.mxu0 %v32
  %128 = vmatprep.subr.mxu0 %v29
  %129 = vmatpush1.msra.mxu0 %v28
  %130 = vmatprep.subr.mxu0 0.0
  %131 = vmatpush2.msra.mxu0 0.0
  %132 = vmatprep.subr.mxu0 0.0
  %133 = vmatpush2.msra.mxu0 0.0
  %134 = vmatprep.subr.mxu0 0.0
  %135 = vmatpush2.msra.mxu0 0.0
  %136 = vmatprep.subr.mxu0 0.0
  %137 = vmatpush2.msra.mxu0 0.0
  %138 = vmatprep.subr.mxu0 0.0
  %139 = vmatpush2.msra.mxu0 0.0
  %140 = vmatprep.subr.mxu0 0.0
  %141 = vmatpush2.msra.mxu0 0.0
  %142 = vmatprep.subr.mxu0 0.0
  %143 = vmatpush2.msra.mxu0 0.0
  %144 = vmatprep.subr.mxu0 0.0
  %145 = vmatpush2.msra.mxu0 0.0
  %146 = vmatprep.subr.mxu0 0.0
  %147 = vmatpush2.msra.mxu0 0.0
  %148 = vmatprep.subr.mxu0 0.0
  %149 = vmatpush2.msra.mxu0 0.0
  %150 = vmatprep.subr.mxu0 0.0
  %151 = vmatpush2.msra.mxu0 0.0
  %152 = vmatprep.subr.mxu0 0.0
  %153 = vmatpush2.msra.mxu0 0.0
  %154 = vmatprep.subr.mxu0 0.0
  %155 = vmatpush2.msra.mxu0 0.0
  %156 = vmatprep.subr.mxu0 0.0
  %157 = vmatpush2.msra.mxu0 0.0
  %158 = vmatprep.subr.mxu0 0.0
  %159 = vmatpush2.msra.mxu0 0.0
  %160 = vmatprep.subr.mxu0 0.0
  %161 = vmatpush2.msra.mxu0 0.0
  %162 = vmatprep.mubr.f32.mxu0 0.0
  %163 = vmatmul.mubr.f32.gmra.mxu0 %v92
  %v164 = vpop.f32.mrf.mxu0
  %v165 = vadd.f32 0.0, %v164
  %v166 = vpop.f32.mrf.mxu0
  %v167 = vadd.f32 0.0, %v166
  %168 = vdwg.mxu0
  %169 = vmatprep.subr.mxu0 %v91
  %170 = vmatpush1.msra.mxu0 %v90
  %171 = vmatprep.subr.mxu0 %v87
  %172 = vmatpush1.msra.mxu0 %v86
  %173 = vmatprep.subr.mxu0 %v83
  %174 = vmatpush1.msra.mxu0 %v82
  %175 = vmatprep.subr.mxu0 %v79
  %176 = vmatpush1.msra.mxu0 %v78
  %177 = vmatprep.subr.mxu0 %v75
  %178 = vmatpush1.msra.mxu0 %v74
  %179 = vmatprep.subr.mxu0 %v71
  %180 = vmatpush1.msra.mxu0 %v70
  %181 = vmatprep.subr.mxu0 %v67
  %182 = vmatpush1.msra.mxu0 %v66
  %183 = vmatprep.subr.mxu0 %v63
  %184 = vmatpush1.msra.mxu0 %v62
  %185 = vmatprep.subr.mxu0 %v59
  %186 = vmatpush1.msra.mxu0 %v58
  %187 = vmatprep.subr.mxu0 %v55
  %188 = vmatpush1.msra.mxu0 %v54
  %189 = vmatprep.subr.mxu0 %v51
  %190 = vmatpush1.msra.mxu0 %v50
  %191 = vmatprep.subr.mxu0 %v47
  %192 = vmatpush1.msra.mxu0 %v46
  %193 = vmatprep.subr.mxu0 %v43
  %194 = vmatpush1.msra.mxu0 %v42
  %195 = vmatprep.subr.mxu0 %v39
  %196 = vmatpush1.msra.mxu0 %v38
  %197 = vmatprep.subr.mxu0 %v35
  %198 = vmatpush1.msra.mxu0 %v34
  %199 = vmatprep.subr.mxu0 %v31
  %200 = vmatpush1.msra.mxu0 %v30
  %201 = vmatprep.subr.mxu0 0.0
  %202 = vmatpush2.msra.mxu0 0.0
  %203 = vmatprep.subr.mxu0 0.0
  %204 = vmatpush2.msra.mxu0 0.0
  %205 = vmatprep.subr.mxu0 0.0
  %206 = vmatpush2.msra.mxu0 0.0
  %207 = vmatprep.subr.mxu0 0.0
  %208 = vmatpush2.msra.mxu0 0.0
  %209 = vmatprep.subr.mxu0 0.0
  %210 = vmatpush2.msra.mxu0 0.0
  %211 = vmatprep.subr.mxu0 0.0
  %212 = vmatpush2.msra.mxu0 0.0
  %213 = vmatprep.subr.mxu0 0.0
  %214 = vmatpush2.msra.mxu0 0.0
  %215 = vmatprep.subr.mxu0 0.0
  %216 = vmatpush2.msra.mxu0 0.0
  %217 = vmatprep.subr.mxu0 0.0
  %218 = vmatpush2.msra.mxu0 0.0
  %219 = vmatprep.subr.mxu0 0.0
  %220 = vmatpush2.msra.mxu0 0.0
  %221 = vmatprep.subr.mxu0 0.0
  %222 = vmatpush2.msra.mxu0 0.0
  %223 = vmatprep.subr.mxu0 0.0
  %224 = vmatpush2.msra.mxu0 0.0
  %225 = vmatprep.subr.mxu0 0.0
  %226 = vmatpush2.msra.mxu0 0.0
  %227 = vmatprep.subr.mxu0 0.0
  %228 = vmatpush2.msra.mxu0 0.0
  %229 = vmatprep.subr.mxu0 0.0
  %230 = vmatpush2.msra.mxu0 0.0
  %231 = vmatprep.subr.mxu0 0.0
  %232 = vmatpush2.msra.mxu0 0.0
  %233 = vmatprep.mubr.f32.mxu0 0.0
  %234 = vmatmul.mubr.f32.gmra.mxu0 %v92
  %v235 = vpop.f32.mrf.mxu0
  %v236 = vadd.f32 0.0, %v235
  %v237 = vpop.f32.mrf.mxu0
  %v238 = vadd.f32 0.0, %v237
  %239 = vdwg.mxu0
  %v240 = vadd.f32 %v94, %v165
  %v241 = vadd.f32 %v95, %v167
  %v242 = vadd.f32 %v96, %v236
  %v243 = vadd.f32 %v97, %v238
  %v244 = vxor.u32 %v240, 2147483648
  %v245 = vmul.f32 %v244, 1.442695
  %v246 = vpow.pop %v245
  %v247 = vadd.f32 %v246, 1.0
  %v248 = vrcp.pop %v247
  %v249 = vmul.f32 1.0, %v248
  %v250 = vxor.u32 %v241, 2147483648
  %v251 = vmul.f32 %v250, 1.442695
  %v252 = vpow.pop %v251
  %v253 = vadd.f32 %v252, 1.0
  %v254 = vrcp.pop %v253
  %v255 = vmul.f32 1.0, %v254
  %v256 = vtanh.pop %v242
  %v257 = vxor.u32 %v243, 2147483648
  %v258 = vmul.f32 %v257, 1.442695
  %v259 = vpow.pop %v258
  %v260 = vadd.f32 %v259, 1.0
  %v261 = vrcp.pop %v260
  %v262 = vmul.f32 1.0, %v261
  %v263 = vmul.f32 %v255, %v93
  %v264 = vmul.f32 %v249, %v256
  %v265 = vadd.f32 %v263, %v264
  %v266 = vtanh.pop %v265
  %v267 = vmul.f32 %v262, %v266
  %268 = vst [vmem:[%s4] sm:$0xff] %v267
  %s269 = scalar_lea.vmem %s0, 32
  %v270 = vld [vmem:[%s269] sm:$0xff]
  %v271 = vld [vmem:[%s269 + $0x8] sm:$0xff]
  %v272 = vld [vmem:[%s269 + $0x10] sm:$0xff]
  %v273 = vld [vmem:[%s269 + $0x18] sm:$0xff]
  %274 = vmatprep.subr.mxu0 %v89
  %275 = vmatpush1.msra.mxu0 %v88
  %276 = vmatprep.subr.mxu0 %v85
  %277 = vmatpush1.msra.mxu0 %v84
  %278 = vmatprep.subr.mxu0 %v81
  %279 = vmatpush1.msra.mxu0 %v80
  %280 = vmatprep.subr.mxu0 %v77
  %281 = vmatpush1.msra.mxu0 %v76
  %282 = vmatprep.subr.mxu0 %v73
  %283 = vmatpush1.msra.mxu0 %v72
  %284 = vmatprep.subr.mxu0 %v69
  %285 = vmatpush1.msra.mxu0 %v68
  %286 = vmatprep.subr.mxu0 %v65
  %287 = vmatpush1.msra.mxu0 %v64
  %288 = vmatprep.subr.mxu0 %v61
  %289 = vmatpush1.msra.mxu0 %v60
  %290 = vmatprep.subr.mxu0 %v57
  %291 = vmatpush1.msra.mxu0 %v56
  %292 = vmatprep.subr.mxu0 %v53
  %293 = vmatpush1.msra.mxu0 %v52
  %294 = vmatprep.subr.mxu0 %v49
  %295 = vmatpush1.msra.mxu0 %v48
  %296 = vmatprep.subr.mxu0 %v45
  %297 = vmatpush1.msra.mxu0 %v44
  %298 = vmatprep.subr.mxu0 %v41
  %299 = vmatpush1.msra.mxu0 %v40
  %300 = vmatprep.subr.mxu0 %v37
  %301 = vmatpush1.msra.mxu0 %v36
  %302 = vmatprep.subr.mxu0 %v33
  %303 = vmatpush1.msra.mxu0 %v32
  %304 = vmatprep.subr.mxu0 %v29
  %305 = vmatpush1.msra.mxu0 %v28
  %306 = vmatprep.subr.mxu0 0.0
  %307 = vmatpush2.msra.mxu0 0.0
  %308 = vmatprep.subr.mxu0 0.0
  %309 = vmatpush2.msra.mxu0 0.0
  %310 = vmatprep.subr.mxu0 0.0
  %311 = vmatpush2.msra.mxu0 0.0
  %312 = vmatprep.subr.mxu0 0.0
  %313 = vmatpush2.msra.mxu0 0.0
  %314 = vmatprep.subr.mxu0 0.0
  %315 = vmatpush2.msra.mxu0 0.0
  %316 = vmatprep.subr.mxu0 0.0
  %317 = vmatpush2.msra.mxu0 0.0
  %318 = vmatprep.subr.mxu0 0.0
  %319 = vmatpush2.msra.mxu0 0.0
  %320 = vmatprep.subr.mxu0 0.0
  %321 = vmatpush2.msra.mxu0 0.0
  %322 = vmatprep.subr.mxu0 0.0
  %323 = vmatpush2.msra.mxu0 0.0
  %324 = vmatprep.subr.mxu0 0.0
  %325 = vmatpush2.msra.mxu0 0.0
  %326 = vmatprep.subr.mxu0 0.0
  %327 = vmatpush2.msra.mxu0 0.0
  %328 = vmatprep.subr.mxu0 0.0
  %329 = vmatpush2.msra.mxu0 0.0
  %330 = vmatprep.subr.mxu0 0.0
  %331 = vmatpush2.msra.mxu0 0.0
  %332 = vmatprep.subr.mxu0 0.0
  %333 = vmatpush2.msra.mxu0 0.0
  %334 = vmatprep.subr.mxu0 0.0
  %335 = vmatpush2.msra.mxu0 0.0
  %336 = vmatprep.subr.mxu0 0.0
  %337 = vmatpush2.msra.mxu0 0.0
  %338 = vmatprep.mubr.f32.mxu0 0.0
  %339 = vmatmul.mubr.f32.gmra.mxu0 %v267
  %v340 = vpop.f32.mrf.mxu0
  %v341 = vadd.f32 0.0, %v340
  %v342 = vpop.f32.mrf.mxu0
  %v343 = vadd.f32 0.0, %v342
  %344 = vdwg.mxu0
  %345 = vmatprep.subr.mxu0 %v91
  %346 = vmatpush1.msra.mxu0 %v90
  %347 = vmatprep.subr.mxu0 %v87
  %348 = vmatpush1.msra.mxu0 %v86
  %349 = vmatprep.subr.mxu0 %v83
  %350 = vmatpush1.msra.mxu0 %v82
  %351 = vmatprep.subr.mxu0 %v79
  %352 = vmatpush1.msra.mxu0 %v78
  %353 = vmatprep.subr.mxu0 %v75
  %354 = vmatpush1.msra.mxu0 %v74
  %355 = vmatprep.subr.mxu0 %v71
  %356 = vmatpush1.msra.mxu0 %v70
  %357 = vmatprep.subr.mxu0 %v67
  %358 = vmatpush1.msra.mxu0 %v66
  %359 = vmatprep.subr.mxu0 %v63
  %360 = vmatpush1.msra.mxu0 %v62
  %361 = vmatprep.subr.mxu0 %v59
  %362 = vmatpush1.msra.mxu0 %v58
  %363 = vmatprep.subr.mxu0 %v55
  %364 = vmatpush1.msra.mxu0 %v54
  %365 = vmatprep.subr.mxu0 %v51
  %366 = vmatpush1.msra.mxu0 %v50
  %367 = vmatprep.subr.mxu0 %v47
  %368 = vmatpush1.msra.mxu0 %v46
  %369 = vmatprep.subr.mxu0 %v43
  %370 = vmatpush1.msra.mxu0 %v42
  %371 = vmatprep.subr.mxu0 %v39
  %372 = vmatpush1.msra.mxu0 %v38
  %373 = vmatprep.subr.mxu0 %v35
  %374 = vmatpush1.msra.mxu0 %v34
  %375 = vmatprep.subr.mxu0 %v31
  %376 = vmatpush1.msra.mxu0 %v30
  %377 = vmatprep.subr.mxu0 0.0
  %378 = vmatpush2.msra.mxu0 0.0
  %379 = vmatprep.subr.mxu0 0.0
  %380 = vmatpush2.msra.mxu0 0.0
  %381 = vmatprep.subr.mxu0 0.0
  %382 = vmatpush2.msra.mxu0 0.0
  %383 = vmatprep.subr.mxu0 0.0
  %384 = vmatpush2.msra.mxu0 0.0
  %385 = vmatprep.subr.mxu0 0.0
  %386 = vmatpush2.msra.mxu0 0.0
  %387 = vmatprep.subr.mxu0 0.0
  %388 = vmatpush2.msra.mxu0 0.0
  %389 = vmatprep.subr.mxu0 0.0
  %390 = vmatpush2.msra.mxu0 0.0
  %391 = vmatprep.subr.mxu0 0.0
  %392 = vmatpush2.msra.mxu0 0.0
  %393 = vmatprep.subr.mxu0 0.0
  %394 = vmatpush2.msra.mxu0 0.0
  %395 = vmatprep.subr.mxu0 0.0
  %396 = vmatpush2.msra.mxu0 0.0
  %397 = vmatprep.subr.mxu0 0.0
  %398 = vmatpush2.msra.mxu0 0.0
  %399 = vmatprep.subr.mxu0 0.0
  %400 = vmatpush2.msra.mxu0 0.0
  %401 = vmatprep.subr.mxu0 0.0
  %402 = vmatpush2.msra.mxu0 0.0
  %403 = vmatprep.subr.mxu0 0.0
  %404 = vmatpush2.msra.mxu0 0.0
  %405 = vmatprep.subr.mxu0 0.0
  %406 = vmatpush2.msra.mxu0 0.0
  %407 = vmatprep.subr.mxu0 0.0
  %408 = vmatpush2.msra.mxu0 0.0
  %409 = vmatprep.mubr.f32.mxu0 0.0
  %410 = vmatmul.mubr.f32.gmra.mxu0 %v267
  %v411 = vpop.f32.mrf.mxu0
  %v412 = vadd.f32 0.0, %v411
  %v413 = vpop.f32.mrf.mxu0
  %v414 = vadd.f32 0.0, %v413
  %415 = vdwg.mxu0
  %v416 = vadd.f32 %v270, %v341
  %v417 = vadd.f32 %v271, %v343
  %v418 = vadd.f32 %v272, %v412
  %v419 = vadd.f32 %v273, %v414
  %v420 = vxor.u32 %v416, 2147483648
  %v421 = vmul.f32 %v420, 1.442695
  %v422 = vpow.pop %v421
  %v423 = vadd.f32 %v422, 1.0
  %v424 = vrcp.pop %v423
  %v425 = vmul.f32 1.0, %v424
  %v426 = vxor.u32 %v417, 2147483648
  %v427 = vmul.f32 %v426, 1.442695
  %v428 = vpow.pop %v427
  %v429 = vadd.f32 %v428, 1.0
  %v430 = vrcp.pop %v429
  %v431 = vmul.f32 1.0, %v430
  %v432 = vtanh.pop %v418
  %v433 = vxor.u32 %v419, 2147483648
  %v434 = vmul.f32 %v433, 1.442695
  %v435 = vpow.pop %v434
  %v436 = vadd.f32 %v435, 1.0
  %v437 = vrcp.pop %v436
  %v438 = vmul.f32 1.0, %v437
  %v439 = vmul.f32 %v431, %v265
  %v440 = vmul.f32 %v425, %v432
  %v441 = vadd.f32 %v439, %v440
  %v442 = vtanh.pop %v441
  %v443 = vmul.f32 %v438, %v442
  %s444 = scalar_lea.vmem %s4, 8
  %445 = vst [vmem:[%s444] sm:$0xff] %v443
  %s446 = scalar_lea.vmem %s0, 64
  %v447 = vld [vmem:[%s446] sm:$0xff]
  %v448 = vld [vmem:[%s446 + $0x8] sm:$0xff]
  %v449 = vld [vmem:[%s446 + $0x10] sm:$0xff]
  %v450 = vld [vmem:[%s446 + $0x18] sm:$0xff]
  %451 = vmatprep.subr.mxu0 %v89
  %452 = vmatpush1.msra.mxu0 %v88
  %453 = vmatprep.subr.mxu0 %v85
  %454 = vmatpush1.msra.mxu0 %v84
  %455 = vmatprep.subr.mxu0 %v81
  %456 = vmatpush1.msra.mxu0 %v80
  %457 = vmatprep.subr.mxu0 %v77
  %458 = vmatpush1.msra.mxu0 %v76
  %459 = vmatprep.subr.mxu0 %v73
  %460 = vmatpush1.msra.mxu0 %v72
  %461 = vmatprep.subr.mxu0 %v69
  %462 = vmatpush1.msra.mxu0 %v68
  %463 = vmatprep.subr.mxu0 %v65
  %464 = vmatpush1.msra.mxu0 %v64
  %465 = vmatprep.subr.mxu0 %v61
  %466 = vmatpush1.msra.mxu0 %v60
  %467 = vmatprep.subr.mxu0 %v57
  %468 = vmatpush1.msra.mxu0 %v56
  %469 = vmatprep.subr.mxu0 %v53
  %470 = vmatpush1.msra.mxu0 %v52
  %471 = vmatprep.subr.mxu0 %v49
  %472 = vmatpush1.msra.mxu0 %v48
  %473 = vmatprep.subr.mxu0 %v45
  %474 = vmatpush1.msra.mxu0 %v44
  %475 = vmatprep.subr.mxu0 %v41
  %476 = vmatpush1.msra.mxu0 %v40
  %477 = vmatprep.subr.mxu0 %v37
  %478 = vmatpush1.msra.mxu0 %v36
  %479 = vmatprep.subr.mxu0 %v33
  %480 = vmatpush1.msra.mxu0 %v32
  %481 = vmatprep.subr.mxu0 %v29
  %482 = vmatpush1.msra.mxu0 %v28
  %483 = vmatprep.subr.mxu0 0.0
  %484 = vmatpush2.msra.mxu0 0.0
  %485 = vmatprep.subr.mxu0 0.0
  %486 = vmatpush2.msra.mxu0 0.0
  %487 = vmatprep.subr.mxu0 0.0
  %488 = vmatpush2.msra.mxu0 0.0
  %489 = vmatprep.subr.mxu0 0.0
  %490 = vmatpush2.msra.mxu0 0.0
  %491 = vmatprep.subr.mxu0 0.0
  %492 = vmatpush2.msra.mxu0 0.0
  %493 = vmatprep.subr.mxu0 0.0
  %494 = vmatpush2.msra.mxu0 0.0
  %495 = vmatprep.subr.mxu0 0.0
  %496 = vmatpush2.msra.mxu0 0.0
  %497 = vmatprep.subr.mxu0 0.0
  %498 = vmatpush2.msra.mxu0 0.0
  %499 = vmatprep.subr.mxu0 0.0
  %500 = vmatpush2.msra.mxu0 0.0
  %501 = vmatprep.subr.mxu0 0.0
  %502 = vmatpush2.msra.mxu0 0.0
  %503 = vmatprep.subr.mxu0 0.0
  %504 = vmatpush2.msra.mxu0 0.0
  %505 = vmatprep.subr.mxu0 0.0
  %506 = vmatpush2.msra.mxu0 0.0
  %507 = vmatprep.subr.mxu0 0.0
  %508 = vmatpush2.msra.mxu0 0.0
  %509 = vmatprep.subr.mxu0 0.0
  %510 = vmatpush2.msra.mxu0 0.0
  %511 = vmatprep.subr.mxu0 0.0
  %512 = vmatpush2.msra.mxu0 0.0
  %513 = vmatprep.subr.mxu0 0.0
  %514 = vmatpush2.msra.mxu0 0.0
  %515 = vmatprep.mubr.f32.mxu0 0.0
  %516 = vmatmul.mubr.f32.gmra.mxu0 %v443
  %v517 = vpop.f32.mrf.mxu0
  %v518 = vadd.f32 0.0, %v517
  %v519 = vpop.f32.mrf.mxu0
  %v520 = vadd.f32 0.0, %v519
  %521 = vdwg.mxu0
  %522 = vmatprep.subr.mxu0 %v91
  %523 = vmatpush1.msra.mxu0 %v90
  %524 = vmatprep.subr.mxu0 %v87
  %525 = vmatpush1.msra.mxu0 %v86
  %526 = vmatprep.subr.mxu0 %v83
  %527 = vmatpush1.msra.mxu0 %v82
  %528 = vmatprep.subr.mxu0 %v79
  %529 = vmatpush1.msra.mxu0 %v78
  %530 = vmatprep.subr.mxu0 %v75
  %531 = vmatpush1.msra.mxu0 %v74
  %532 = vmatprep.subr.mxu0 %v71
  %533 = vmatpush1.msra.mxu0 %v70
  %534 = vmatprep.subr.mxu0 %v67
  %535 = vmatpush1.msra.mxu0 %v66
  %536 = vmatprep.subr.mxu0 %v63
  %537 = vmatpush1.msra.mxu0 %v62
  %538 = vmatprep.subr.mxu0 %v59
  %539 = vmatpush1.msra.mxu0 %v58
  %540 = vmatprep.subr.mxu0 %v55
  %541 = vmatpush1.msra.mxu0 %v54
  %542 = vmatprep.subr.mxu0 %v51
  %543 = vmatpush1.msra.mxu0 %v50
  %544 = vmatprep.subr.mxu0 %v47
  %545 = vmatpush1.msra.mxu0 %v46
  %546 = vmatprep.subr.mxu0 %v43
  %547 = vmatpush1.msra.mxu0 %v42
  %548 = vmatprep.subr.mxu0 %v39
  %549 = vmatpush1.msra.mxu0 %v38
  %550 = vmatprep.subr.mxu0 %v35
  %551 = vmatpush1.msra.mxu0 %v34
  %552 = vmatprep.subr.mxu0 %v31
  %553 = vmatpush1.msra.mxu0 %v30
  %554 = vmatprep.subr.mxu0 0.0
  %555 = vmatpush2.msra.mxu0 0.0
  %556 = vmatprep.subr.mxu0 0.0
  %557 = vmatpush2.msra.mxu0 0.0
  %558 = vmatprep.subr.mxu0 0.0
  %559 = vmatpush2.msra.mxu0 0.0
  %560 = vmatprep.subr.mxu0 0.0
  %561 = vmatpush2.msra.mxu0 0.0
  %562 = vmatprep.subr.mxu0 0.0
  %563 = vmatpush2.msra.mxu0 0.0
  %564 = vmatprep.subr.mxu0 0.0
  %565 = vmatpush2.msra.mxu0 0.0
  %566 = vmatprep.subr.mxu0 0.0
  %567 = vmatpush2.msra.mxu0 0.0
  %568 = vmatprep.subr.mxu0 0.0
  %569 = vmatpush2.msra.mxu0 0.0
  %570 = vmatprep.subr.mxu0 0.0
  %571 = vmatpush2.msra.mxu0 0.0
  %572 = vmatprep.subr.mxu0 0.0
  %573 = vmatpush2.msra.mxu0 0.0
  %574 = vmatprep.subr.mxu0 0.0
  %575 = vmatpush2.msra.mxu0 0.0
  %576 = vmatprep.subr.mxu0 0.0
  %577 = vmatpush2.msra.mxu0 0.0
  %578 = vmatprep.subr.mxu0 0.0
  %579 = vmatpush2.msra.mxu0 0.0
  %580 = vmatprep.subr.mxu0 0.0
  %581 = vmatpush2.msra.mxu0 0.0
  %582 = vmatprep.subr.mxu0 0.0
  %583 = vmatpush2.msra.mxu0 0.0
  %584 = vmatprep.subr.mxu0 0.0
  %585 = vmatpush2.msra.mxu0 0.0
  %586 = vmatprep.mubr.f32.mxu0 0.0
  %587 = vmatmul.mubr.f32.gmra.mxu0 %v443
  %v588 = vpop.f32.mrf.mxu0
  %v589 = vadd.f32 0.0, %v588
  %v590 = vpop.f32.mrf.mxu0
  %v591 = vadd.f32 0.0, %v590
  %592 = vdwg.mxu0
  %v593 = vadd.f32 %v447, %v518
  %v594 = vadd.f32 %v448, %v520
  %v595 = vadd.f32 %v449, %v589
  %v596 = vadd.f32 %v450, %v591
  %v597 = vxor.u32 %v593, 2147483648
  %v598 = vmul.f32 %v597, 1.442695
  %v599 = vpow.pop %v598
  %v600 = vadd.f32 %v599, 1.0
  %v601 = vrcp.pop %v600
  %v602 = vmul.f32 1.0, %v601
  %v603 = vxor.u32 %v594, 2147483648
  %v604 = vmul.f32 %v603, 1.442695
  %v605 = vpow.pop %v604
  %v606 = vadd.f32 %v605, 1.0
  %v607 = vrcp.pop %v606
  %v608 = vmul.f32 1.0, %v607
  %v609 = vtanh.pop %v595
  %v610 = vxor.u32 %v596, 2147483648
  %v611 = vmul.f32 %v610, 1.442695
  %v612 = vpow.pop %v611
  %v613 = vadd.f32 %v612, 1.0
  %v614 = vrcp.pop %v613
  %v615 = vmul.f32 1.0, %v614
  %v616 = vmul.f32 %v608, %v441
  %v617 = vmul.f32 %v602, %v609
  %v618 = vadd.f32 %v616, %v617
  %v619 = vtanh.pop %v618
  %v620 = vmul.f32 %v615, %v619
  %s621 = scalar_lea.vmem %s4, 16
  %622 = vst [vmem:[%s621] sm:$0xff] %v620
  %s623 = scalar_lea.vmem %s0, 96
  %v624 = vld [vmem:[%s623] sm:$0xff]
  %v625 = vld [vmem:[%s623 + $0x8] sm:$0xff]
  %v626 = vld [vmem:[%s623 + $0x10] sm:$0xff]
  %v627 = vld [vmem:[%s623 + $0x18] sm:$0xff]
  %628 = vmatprep.subr.mxu0 %v89
  %629 = vmatpush1.msra.mxu0 %v88
  %630 = vmatprep.subr.mxu0 %v85
  %631 = vmatpush1.msra.mxu0 %v84
  %632 = vmatprep.subr.mxu0 %v81
  %633 = vmatpush1.msra.mxu0 %v80
  %634 = vmatprep.subr.mxu0 %v77
  %635 = vmatpush1.msra.mxu0 %v76
  %636 = vmatprep.subr.mxu0 %v73
  %637 = vmatpush1.msra.mxu0 %v72
  %638 = vmatprep.subr.mxu0 %v69
  %639 = vmatpush1.msra.mxu0 %v68
  %640 = vmatprep.subr.mxu0 %v65
  %641 = vmatpush1.msra.mxu0 %v64
  %642 = vmatprep.subr.mxu0 %v61
  %643 = vmatpush1.msra.mxu0 %v60
  %644 = vmatprep.subr.mxu0 %v57
  %645 = vmatpush1.msra.mxu0 %v56
  %646 = vmatprep.subr.mxu0 %v53
  %647 = vmatpush1.msra.mxu0 %v52
  %648 = vmatprep.subr.mxu0 %v49
  %649 = vmatpush1.msra.mxu0 %v48
  %650 = vmatprep.subr.mxu0 %v45
  %651 = vmatpush1.msra.mxu0 %v44
  %652 = vmatprep.subr.mxu0 %v41
  %653 = vmatpush1.msra.mxu0 %v40
  %654 = vmatprep.subr.mxu0 %v37
  %655 = vmatpush1.msra.mxu0 %v36
  %656 = vmatprep.subr.mxu0 %v33
  %657 = vmatpush1.msra.mxu0 %v32
  %658 = vmatprep.subr.mxu0 %v29
  %659 = vmatpush1.msra.mxu0 %v28
  %660 = vmatprep.subr.mxu0 0.0
  %661 = vmatpush2.msra.mxu0 0.0
  %662 = vmatprep.subr.mxu0 0.0
  %663 = vmatpush2.msra.mxu0 0.0
  %664 = vmatprep.subr.mxu0 0.0
  %665 = vmatpush2.msra.mxu0 0.0
  %666 = vmatprep.subr.mxu0 0.0
  %667 = vmatpush2.msra.mxu0 0.0
  %668 = vmatprep.subr.mxu0 0.0
  %669 = vmatpush2.msra.mxu0 0.0
  %670 = vmatprep.subr.mxu0 0.0
  %671 = vmatpush2.msra.mxu0 0.0
  %672 = vmatprep.subr.mxu0 0.0
  %673 = vmatpush2.msra.mxu0 0.0
  %674 = vmatprep.subr.mxu0 0.0
  %675 = vmatpush2.msra.mxu0 0.0
  %676 = vmatprep.subr.mxu0 0.0
  %677 = vmatpush2.msra.mxu0 0.0
  %678 = vmatprep.subr.mxu0 0.0
  %679 = vmatpush2.msra.mxu0 0.0
  %680 = vmatprep.subr.mxu0 0.0
  %681 = vmatpush2.msra.mxu0 0.0
  %682 = vmatprep.subr.mxu0 0.0
  %683 = vmatpush2.msra.mxu0 0.0
  %684 = vmatprep.subr.mxu0 0.0
  %685 = vmatpush2.msra.mxu0 0.0
  %686 = vmatprep.subr.mxu0 0.0
  %687 = vmatpush2.msra.mxu0 0.0
  %688 = vmatprep.subr.mxu0 0.0
  %689 = vmatpush2.msra.mxu0 0.0
  %690 = vmatprep.subr.mxu0 0.0
  %691 = vmatpush2.msra.mxu0 0.0
  %692 = vmatprep.mubr.f32.mxu0 0.0
  %693 = vmatmul.mubr.f32.gmra.mxu0 %v620
  %v694 = vpop.f32.mrf.mxu0
  %v695 = vadd.f32 0.0, %v694
  %v696 = vpop.f32.mrf.mxu0
  %v697 = vadd.f32 0.0, %v696
  %698 = vdwg.mxu0
  %699 = vmatprep.subr.mxu0 %v91
  %700 = vmatpush1.msra.mxu0 %v90
  %701 = vmatprep.subr.mxu0 %v87
  %702 = vmatpush1.msra.mxu0 %v86
  %703 = vmatprep.subr.mxu0 %v83
  %704 = vmatpush1.msra.mxu0 %v82
  %705 = vmatprep.subr.mxu0 %v79
  %706 = vmatpush1.msra.mxu0 %v78
  %707 = vmatprep.subr.mxu0 %v75
  %708 = vmatpush1.msra.mxu0 %v74
  %709 = vmatprep.subr.mxu0 %v71
  %710 = vmatpush1.msra.mxu0 %v70
  %711 = vmatprep.subr.mxu0 %v67
  %712 = vmatpush1.msra.mxu0 %v66
  %713 = vmatprep.subr.mxu0 %v63
  %714 = vmatpush1.msra.mxu0 %v62
  %715 = vmatprep.subr.mxu0 %v59
  %716 = vmatpush1.msra.mxu0 %v58
  %717 = vmatprep.subr.mxu0 %v55
  %718 = vmatpush1.msra.mxu0 %v54
  %719 = vmatprep.subr.mxu0 %v51
  %720 = vmatpush1.msra.mxu0 %v50
  %721 = vmatprep.subr.mxu0 %v47
  %722 = vmatpush1.msra.mxu0 %v46
  %723 = vmatprep.subr.mxu0 %v43
  %724 = vmatpush1.msra.mxu0 %v42
  %725 = vmatprep.subr.mxu0 %v39
  %726 = vmatpush1.msra.mxu0 %v38
  %727 = vmatprep.subr.mxu0 %v35
  %728 = vmatpush1.msra.mxu0 %v34
  %729 = vmatprep.subr.mxu0 %v31
  %730 = vmatpush1.msra.mxu0 %v30
  %731 = vmatprep.subr.mxu0 0.0
  %732 = vmatpush2.msra.mxu0 0.0
  %733 = vmatprep.subr.mxu0 0.0
  %734 = vmatpush2.msra.mxu0 0.0
  %735 = vmatprep.subr.mxu0 0.0
  %736 = vmatpush2.msra.mxu0 0.0
  %737 = vmatprep.subr.mxu0 0.0
  %738 = vmatpush2.msra.mxu0 0.0
  %739 = vmatprep.subr.mxu0 0.0
  %740 = vmatpush2.msra.mxu0 0.0
  %741 = vmatprep.subr.mxu0 0.0
  %742 = vmatpush2.msra.mxu0 0.0
  %743 = vmatprep.subr.mxu0 0.0
  %744 = vmatpush2.msra.mxu0 0.0
  %745 = vmatprep.subr.mxu0 0.0
  %746 = vmatpush2.msra.mxu0 0.0
  %747 = vmatprep.subr.mxu0 0.0
  %748 = vmatpush2.msra.mxu0 0.0
  %749 = vmatprep.subr.mxu0 0.0
  %750 = vmatpush2.msra.mxu0 0.0
  %751 = vmatprep.subr.mxu0 0.0
  %752 = vmatpush2.msra.mxu0 0.0
  %753 = vmatprep.subr.mxu0 0.0
  %754 = vmatpush2.msra.mxu0 0.0
  %755 = vmatprep.subr.mxu0 0.0
  %756 = vmatpush2.msra.mxu0 0.0
  %757 = vmatprep.subr.mxu0 0.0
  %758 = vmatpush2.msra.mxu0 0.0
  %759 = vmatprep.subr.mxu0 0.0
  %760 = vmatpush2.msra.mxu0 0.0
  %761 = vmatprep.subr.mxu0 0.0
  %762 = vmatpush2.msra.mxu0 0.0
  %763 = vmatprep.mubr.f32.mxu0 0.0
  %764 = vmatmul.mubr.f32.gmra.mxu0 %v620
  %v765 = vpop.f32.mrf.mxu0
  %v766 = vadd.f32 0.0, %v765
  %v767 = vpop.f32.mrf.mxu0
  %v768 = vadd.f32 0.0, %v767
  %769 = vdwg.mxu0
  %v770 = vadd.f32 %v624, %v695
  %v771 = vadd.f32 %v625, %v697
  %v772 = vadd.f32 %v626, %v766
  %v773 = vadd.f32 %v627, %v768
  %v774 = vxor.u32 %v770, 2147483648
  %v775 = vmul.f32 %v774, 1.442695
  %v776 = vpow.pop %v775
  %v777 = vadd.f32 %v776, 1.0
  %v778 = vrcp.pop %v777
  %v779 = vmul.f32 1.0, %v778
  %v780 = vxor.u32 %v771, 2147483648
  %v781 = vmul.f32 %v780, 1.442695
  %v782 = vpow.pop %v781
  %v783 = vadd.f32 %v782, 1.0
  %v784 = vrcp.pop %v783
  %v785 = vmul.f32 1.0, %v784
  %v786 = vtanh.pop %v772
  %v787 = vxor.u32 %v773, 2147483648
  %v788 = vmul.f32 %v787, 1.442695
  %v789 = vpow.pop %v788
  %v790 = vadd.f32 %v789, 1.0
  %v791 = vrcp.pop %v790
  %v792 = vmul.f32 1.0, %v791
  %v793 = vmul.f32 %v785, %v618
  %v794 = vmul.f32 %v779, %v786
  %v795 = vadd.f32 %v793, %v794
  %v796 = vtanh.pop %v795
  %v797 = vmul.f32 %v792, %v796
  %s798 = scalar_lea.vmem %s4, 24
  %799 = vst [vmem:[%s798] sm:$0xff] %v797
  %s800 = scalar_lea.vmem %s0, 128
  %v801 = vld [vmem:[%s800] sm:$0xff]
  %v802 = vld [vmem:[%s800 + $0x8] sm:$0xff]
  %v803 = vld [vmem:[%s800 + $0x10] sm:$0xff]
  %v804 = vld [vmem:[%s800 + $0x18] sm:$0xff]
  %805 = vmatprep.subr.mxu0 %v89
  %806 = vmatpush1.msra.mxu0 %v88
  %807 = vmatprep.subr.mxu0 %v85
  %808 = vmatpush1.msra.mxu0 %v84
  %809 = vmatprep.subr.mxu0 %v81
  %810 = vmatpush1.msra.mxu0 %v80
  %811 = vmatprep.subr.mxu0 %v77
  %812 = vmatpush1.msra.mxu0 %v76
  %813 = vmatprep.subr.mxu0 %v73
  %814 = vmatpush1.msra.mxu0 %v72
  %815 = vmatprep.subr.mxu0 %v69
  %816 = vmatpush1.msra.mxu0 %v68
  %817 = vmatprep.subr.mxu0 %v65
  %818 = vmatpush1.msra.mxu0 %v64
  %819 = vmatprep.subr.mxu0 %v61
  %820 = vmatpush1.msra.mxu0 %v60
  %821 = vmatprep.subr.mxu0 %v57
  %822 = vmatpush1.msra.mxu0 %v56
  %823 = vmatprep.subr.mxu0 %v53
  %824 = vmatpush1.msra.mxu0 %v52
  %825 = vmatprep.subr.mxu0 %v49
  %826 = vmatpush1.msra.mxu0 %v48
  %827 = vmatprep.subr.mxu0 %v45
  %828 = vmatpush1.msra.mxu0 %v44
  %829 = vmatprep.subr.mxu0 %v41
  %830 = vmatpush1.msra.mxu0 %v40
  %831 = vmatprep.subr.mxu0 %v37
  %832 = vmatpush1.msra.mxu0 %v36
  %833 = vmatprep.subr.mxu0 %v33
  %834 = vmatpush1.msra.mxu0 %v32
  %835 = vmatprep.subr.mxu0 %v29
  %836 = vmatpush1.msra.mxu0 %v28
  %837 = vmatprep.subr.mxu0 0.0
  %838 = vmatpush2.msra.mxu0 0.0
  %839 = vmatprep.subr.mxu0 0.0
  %840 = vmatpush2.msra.mxu0 0.0
  %841 = vmatprep.subr.mxu0 0.0
  %842 = vmatpush2.msra.mxu0 0.0
  %843 = vmatprep.subr.mxu0 0.0
  %844 = vmatpush2.msra.mxu0 0.0
  %845 = vmatprep.subr.mxu0 0.0
  %846 = vmatpush2.msra.mxu0 0.0
  %847 = vmatprep.subr.mxu0 0.0
  %848 = vmatpush2.msra.mxu0 0.0
  %849 = vmatprep.subr.mxu0 0.0
  %850 = vmatpush2.msra.mxu0 0.0
  %851 = vmatprep.subr.mxu0 0.0
  %852 = vmatpush2.msra.mxu0 0.0
  %853 = vmatprep.subr.mxu0 0.0
  %854 = vmatpush2.msra.mxu0 0.0
  %855 = vmatprep.subr.mxu0 0.0
  %856 = vmatpush2.msra.mxu0 0.0
  %857 = vmatprep.subr.mxu0 0.0
  %858 = vmatpush2.msra.mxu0 0.0
  %859 = vmatprep.subr.mxu0 0.0
  %860 = vmatpush2.msra.mxu0 0.0
  %861 = vmatprep.subr.mxu0 0.0
  %862 = vmatpush2.msra.mxu0 0.0
  %863 = vmatprep.subr.mxu0 0.0
  %864 = vmatpush2.msra.mxu0 0.0
  %865 = vmatprep.subr.mxu0 0.0
  %866 = vmatpush2.msra.mxu0 0.0
  %867 = vmatprep.subr.mxu0 0.0
  %868 = vmatpush2.msra.mxu0 0.0
  %869 = vmatprep.mubr.f32.mxu0 0.0
  %870 = vmatmul.mubr.f32.gmra.mxu0 %v797
  %v871 = vpop.f32.mrf.mxu0
  %v872 = vadd.f32 0.0, %v871
  %v873 = vpop.f32.mrf.mxu0
  %v874 = vadd.f32 0.0, %v873
  %875 = vdwg.mxu0
  %876 = vmatprep.subr.mxu0 %v91
  %877 = vmatpush1.msra.mxu0 %v90
  %878 = vmatprep.subr.mxu0 %v87
  %879 = vmatpush1.msra.mxu0 %v86
  %880 = vmatprep.subr.mxu0 %v83
  %881 = vmatpush1.msra.mxu0 %v82
  %882 = vmatprep.subr.mxu0 %v79
  %883 = vmatpush1.msra.mxu0 %v78
  %884 = vmatprep.subr.mxu0 %v75
  %885 = vmatpush1.msra.mxu0 %v74
  %886 = vmatprep.subr.mxu0 %v71
  %887 = vmatpush1.msra.mxu0 %v70
  %888 = vmatprep.subr.mxu0 %v67
  %889 = vmatpush1.msra.mxu0 %v66
  %890 = vmatprep.subr.mxu0 %v63
  %891 = vmatpush1.msra.mxu0 %v62
  %892 = vmatprep.subr.mxu0 %v59
  %893 = vmatpush1.msra.mxu0 %v58
  %894 = vmatprep.subr.mxu0 %v55
  %895 = vmatpush1.msra.mxu0 %v54
  %896 = vmatprep.subr.mxu0 %v51
  %897 = vmatpush1.msra.mxu0 %v50
  %898 = vmatprep.subr.mxu0 %v47
  %899 = vmatpush1.msra.mxu0 %v46
  %900 = vmatprep.subr.mxu0 %v43
  %901 = vmatpush1.msra.mxu0 %v42
  %902 = vmatprep.subr.mxu0 %v39
  %903 = vmatpush1.msra.mxu0 %v38
  %904 = vmatprep.subr.mxu0 %v35
  %905 = vmatpush1.msra.mxu0 %v34
  %906 = vmatprep.subr.mxu0 %v31
  %907 = vmatpush1.msra.mxu0 %v30
  %908 = vmatprep.subr.mxu0 0.0
  %909 = vmatpush2.msra.mxu0 0.0
  %910 = vmatprep.subr.mxu0 0.0
  %911 = vmatpush2.msra.mxu0 0.0
  %912 = vmatprep.subr.mxu0 0.0
  %913 = vmatpush2.msra.mxu0 0.0
  %914 = vmatprep.subr.mxu0 0.0
  %915 = vmatpush2.msra.mxu0 0.0
  %916 = vmatprep.subr.mxu0 0.0
  %917 = vmatpush2.msra.mxu0 0.0
  %918 = vmatprep.subr.mxu0 0.0
  %919 = vmatpush2.msra.mxu0 0.0
  %920 = vmatprep.subr.mxu0 0.0
  %921 = vmatpush2.msra.mxu0 0.0
  %922 = vmatprep.subr.mxu0 0.0
  %923 = vmatpush2.msra.mxu0 0.0
  %924 = vmatprep.subr.mxu0 0.0
  %925 = vmatpush2.msra.mxu0 0.0
  %926 = vmatprep.subr.mxu0 0.0
  %927 = vmatpush2.msra.mxu0 0.0
  %928 = vmatprep.subr.mxu0 0.0
  %929 = vmatpush2.msra.mxu0 0.0
  %930 = vmatprep.subr.mxu0 0.0
  %931 = vmatpush2.msra.mxu0 0.0
  %932 = vmatprep.subr.mxu0 0.0
  %933 = vmatpush2.msra.mxu0 0.0
  %934 = vmatprep.subr.mxu0 0.0
  %935 = vmatpush2.msra.mxu0 0.0
  %936 = vmatprep.subr.mxu0 0.0
  %937 = vmatpush2.msra.mxu0 0.0
  %938 = vmatprep.subr.mxu0 0.0
  %939 = vmatpush2.msra.mxu0 0.0
  %940 = vmatprep.mubr.f32.mxu0 0.0
  %941 = vmatmul.mubr.f32.gmra.mxu0 %v797
  %v942 = vpop.f32.mrf.mxu0
  %v943 = vadd.f32 0.0, %v942
  %v944 = vpop.f32.mrf.mxu0
  %v945 = vadd.f32 0.0, %v944
  %946 = vdwg.mxu0
  %v947 = vadd.f32 %v801, %v872
  %v948 = vadd.f32 %v802, %v874
  %v949 = vadd.f32 %v803, %v943
  %v950 = vadd.f32 %v804, %v945
  %v951 = vxor.u32 %v947, 2147483648
  %v952 = vmul.f32 %v951, 1.442695
  %v953 = vpow.pop %v952
  %v954 = vadd.f32 %v953, 1.0
  %v955 = vrcp.pop %v954
  %v956 = vmul.f32 1.0, %v955
  %v957 = vxor.u32 %v948, 2147483648
  %v958 = vmul.f32 %v957, 1.442695
  %v959 = vpow.pop %v958
  %v960 = vadd.f32 %v959, 1.0
  %v961 = vrcp.pop %v960
  %v962 = vmul.f32 1.0, %v961
  %v963 = vtanh.pop %v949
  %v964 = vxor.u32 %v950, 2147483648
  %v965 = vmul.f32 %v964, 1.442695
  %v966 = vpow.pop %v965
  %v967 = vadd.f32 %v966, 1.0
  %v968 = vrcp.pop %v967
  %v969 = vmul.f32 1.0, %v968
  %v970 = vmul.f32 %v962, %v795
  %v971 = vmul.f32 %v956, %v963
  %v972 = vadd.f32 %v970, %v971
  %v973 = vtanh.pop %v972
  %v974 = vmul.f32 %v969, %v973
  %s975 = scalar_lea.vmem %s4, 32
  %976 = vst [vmem:[%s975] sm:$0xff] %v974
  %s977 = scalar_lea.vmem %s0, 160
  %v978 = vld [vmem:[%s977] sm:$0xff]
  %v979 = vld [vmem:[%s977 + $0x8] sm:$0xff]
  %v980 = vld [vmem:[%s977 + $0x10] sm:$0xff]
  %v981 = vld [vmem:[%s977 + $0x18] sm:$0xff]
  %982 = vmatprep.subr.mxu0 %v89
  %983 = vmatpush1.msra.mxu0 %v88
  %984 = vmatprep.subr.mxu0 %v85
  %985 = vmatpush1.msra.mxu0 %v84
  %986 = vmatprep.subr.mxu0 %v81
  %987 = vmatpush1.msra.mxu0 %v80
  %988 = vmatprep.subr.mxu0 %v77
  %989 = vmatpush1.msra.mxu0 %v76
  %990 = vmatprep.subr.mxu0 %v73
  %991 = vmatpush1.msra.mxu0 %v72
  %992 = vmatprep.subr.mxu0 %v69
  %993 = vmatpush1.msra.mxu0 %v68
  %994 = vmatprep.subr.mxu0 %v65
  %995 = vmatpush1.msra.mxu0 %v64
  %996 = vmatprep.subr.mxu0 %v61
  %997 = vmatpush1.msra.mxu0 %v60
  %998 = vmatprep.subr.mxu0 %v57
  %999 = vmatpush1.msra.mxu0 %v56
  %1000 = vmatprep.subr.mxu0 %v53
  %1001 = vmatpush1.msra.mxu0 %v52
  %1002 = vmatprep.subr.mxu0 %v49
  %1003 = vmatpush1.msra.mxu0 %v48
  %1004 = vmatprep.subr.mxu0 %v45
  %1005 = vmatpush1.msra.mxu0 %v44
  %1006 = vmatprep.subr.mxu0 %v41
  %1007 = vmatpush1.msra.mxu0 %v40
  %1008 = vmatprep.subr.mxu0 %v37
  %1009 = vmatpush1.msra.mxu0 %v36
  %1010 = vmatprep.subr.mxu0 %v33
  %1011 = vmatpush1.msra.mxu0 %v32
  %1012 = vmatprep.subr.mxu0 %v29
  %1013 = vmatpush1.msra.mxu0 %v28
  %1014 = vmatprep.subr.mxu0 0.0
  %1015 = vmatpush2.msra.mxu0 0.0
  %1016 = vmatprep.subr.mxu0 0.0
  %1017 = vmatpush2.msra.mxu0 0.0
  %1018 = vmatprep.subr.mxu0 0.0
  %1019 = vmatpush2.msra.mxu0 0.0
  %1020 = vmatprep.subr.mxu0 0.0
  %1021 = vmatpush2.msra.mxu0 0.0
  %1022 = vmatprep.subr.mxu0 0.0
  %1023 = vmatpush2.msra.mxu0 0.0
  %1024 = vmatprep.subr.mxu0 0.0
  %1025 = vmatpush2.msra.mxu0 0.0
  %1026 = vmatprep.subr.mxu0 0.0
  %1027 = vmatpush2.msra.mxu0 0.0
  %1028 = vmatprep.subr.mxu0 0.0
  %1029 = vmatpush2.msra.mxu0 0.0
  %1030 = vmatprep.subr.mxu0 0.0
  %1031 = vmatpush2.msra.mxu0 0.0
  %1032 = vmatprep.subr.mxu0 0.0
  %1033 = vmatpush2.msra.mxu0 0.0
  %1034 = vmatprep.subr.mxu0 0.0
  %1035 = vmatpush2.msra.mxu0 0.0
  %1036 = vmatprep.subr.mxu0 0.0
  %1037 = vmatpush2.msra.mxu0 0.0
  %1038 = vmatprep.subr.mxu0 0.0
  %1039 = vmatpush2.msra.mxu0 0.0
  %1040 = vmatprep.subr.mxu0 0.0
  %1041 = vmatpush2.msra.mxu0 0.0
  %1042 = vmatprep.subr.mxu0 0.0
  %1043 = vmatpush2.msra.mxu0 0.0
  %1044 = vmatprep.subr.mxu0 0.0
  %1045 = vmatpush2.msra.mxu0 0.0
  %1046 = vmatprep.mubr.f32.mxu0 0.0
  %1047 = vmatmul.mubr.f32.gmra.mxu0 %v974
  %v1048 = vpop.f32.mrf.mxu0
  %v1049 = vadd.f32 0.0, %v1048
  %v1050 = vpop.f32.mrf.mxu0
  %v1051 = vadd.f32 0.0, %v1050
  %1052 = vdwg.mxu0
  %1053 = vmatprep.subr.mxu0 %v91
  %1054 = vmatpush1.msra.mxu0 %v90
  %1055 = vmatprep.subr.mxu0 %v87
  %1056 = vmatpush1.msra.mxu0 %v86
  %1057 = vmatprep.subr.mxu0 %v83
  %1058 = vmatpush1.msra.mxu0 %v82
  %1059 = vmatprep.subr.mxu0 %v79
  %1060 = vmatpush1.msra.mxu0 %v78
  %1061 = vmatprep.subr.mxu0 %v75
  %1062 = vmatpush1.msra.mxu0 %v74
  %1063 = vmatprep.subr.mxu0 %v71
  %1064 = vmatpush1.msra.mxu0 %v70
  %1065 = vmatprep.subr.mxu0 %v67
  %1066 = vmatpush1.msra.mxu0 %v66
  %1067 = vmatprep.subr.mxu0 %v63
  %1068 = vmatpush1.msra.mxu0 %v62
  %1069 = vmatprep.subr.mxu0 %v59
  %1070 = vmatpush1.msra.mxu0 %v58
  %1071 = vmatprep.subr.mxu0 %v55
  %1072 = vmatpush1.msra.mxu0 %v54
  %1073 = vmatprep.subr.mxu0 %v51
  %1074 = vmatpush1.msra.mxu0 %v50
  %1075 = vmatprep.subr.mxu0 %v47
  %1076 = vmatpush1.msra.mxu0 %v46
  %1077 = vmatprep.subr.mxu0 %v43
  %1078 = vmatpush1.msra.mxu0 %v42
  %1079 = vmatprep.subr.mxu0 %v39
  %1080 = vmatpush1.msra.mxu0 %v38
  %1081 = vmatprep.subr.mxu0 %v35
  %1082 = vmatpush1.msra.mxu0 %v34
  %1083 = vmatprep.subr.mxu0 %v31
  %1084 = vmatpush1.msra.mxu0 %v30
  %1085 = vmatprep.subr.mxu0 0.0
  %1086 = vmatpush2.msra.mxu0 0.0
  %1087 = vmatprep.subr.mxu0 0.0
  %1088 = vmatpush2.msra.mxu0 0.0
  %1089 = vmatprep.subr.mxu0 0.0
  %1090 = vmatpush2.msra.mxu0 0.0
  %1091 = vmatprep.subr.mxu0 0.0
  %1092 = vmatpush2.msra.mxu0 0.0
  %1093 = vmatprep.subr.mxu0 0.0
  %1094 = vmatpush2.msra.mxu0 0.0
  %1095 = vmatprep.subr.mxu0 0.0
  %1096 = vmatpush2.msra.mxu0 0.0
  %1097 = vmatprep.subr.mxu0 0.0
  %1098 = vmatpush2.msra.mxu0 0.0
  %1099 = vmatprep.subr.mxu0 0.0
  %1100 = vmatpush2.msra.mxu0 0.0
  %1101 = vmatprep.subr.mxu0 0.0
  %1102 = vmatpush2.msra.mxu0 0.0
  %1103 = vmatprep.subr.mxu0 0.0
  %1104 = vmatpush2.msra.mxu0 0.0
  %1105 = vmatprep.subr.mxu0 0.0
  %1106 = vmatpush2.msra.mxu0 0.0
  %1107 = vmatprep.subr.mxu0 0.0
  %1108 = vmatpush2.msra.mxu0 0.0
  %1109 = vmatprep.subr.mxu0 0.0
  %1110 = vmatpush2.msra.mxu0 0.0
  %1111 = vmatprep.subr.mxu0 0.0
  %1112 = vmatpush2.msra.mxu0 0.0
  %1113 = vmatprep.subr.mxu0 0.0
  %1114 = vmatpush2.msra.mxu0 0.0
  %1115 = vmatprep.subr.mxu0 0.0
  %1116 = vmatpush2.msra.mxu0 0.0
  %1117 = vmatprep.mubr.f32.mxu0 0.0
  %1118 = vmatmul.mubr.f32.gmra.mxu0 %v974
  %v1119 = vpop.f32.mrf.mxu0
  %v1120 = vadd.f32 0.0, %v1119
  %v1121 = vpop.f32.mrf.mxu0
  %v1122 = vadd.f32 0.0, %v1121
  %1123 = vdwg.mxu0
  %v1124 = vadd.f32 %v978, %v1049
  %v1125 = vadd.f32 %v979, %v1051
  %v1126 = vadd.f32 %v980, %v1120
  %v1127 = vadd.f32 %v981, %v1122
  %v1128 = vxor.u32 %v1124, 2147483648
  %v1129 = vmul.f32 %v1128, 1.442695
  %v1130 = vpow.pop %v1129
  %v1131 = vadd.f32 %v1130, 1.0
  %v1132 = vrcp.pop %v1131
  %v1133 = vmul.f32 1.0, %v1132
  %v1134 = vxor.u32 %v1125, 2147483648
  %v1135 = vmul.f32 %v1134, 1.442695
  %v1136 = vpow.pop %v1135
  %v1137 = vadd.f32 %v1136, 1.0
  %v1138 = vrcp.pop %v1137
  %v1139 = vmul.f32 1.0, %v1138
  %v1140 = vtanh.pop %v1126
  %v1141 = vxor.u32 %v1127, 2147483648
  %v1142 = vmul.f32 %v1141, 1.442695
  %v1143 = vpow.pop %v1142
  %v1144 = vadd.f32 %v1143, 1.0
  %v1145 = vrcp.pop %v1144
  %v1146 = vmul.f32 1.0, %v1145
  %v1147 = vmul.f32 %v1139, %v972
  %v1148 = vmul.f32 %v1133, %v1140
  %v1149 = vadd.f32 %v1147, %v1148
  %v1150 = vtanh.pop %v1149
  %v1151 = vmul.f32 %v1146, %v1150
  %s1152 = scalar_lea.vmem %s4, 40
  %1153 = vst [vmem:[%s1152] sm:$0xff] %v1151
  %s1154 = scalar_lea.vmem %s0, 192
  %v1155 = vld [vmem:[%s1154] sm:$0xff]
  %v1156 = vld [vmem:[%s1154 + $0x8] sm:$0xff]
  %v1157 = vld [vmem:[%s1154 + $0x10] sm:$0xff]
  %v1158 = vld [vmem:[%s1154 + $0x18] sm:$0xff]
  %1159 = vmatprep.subr.mxu0 %v89
  %1160 = vmatpush1.msra.mxu0 %v88
  %1161 = vmatprep.subr.mxu0 %v85
  %1162 = vmatpush1.msra.mxu0 %v84
  %1163 = vmatprep.subr.mxu0 %v81
  %1164 = vmatpush1.msra.mxu0 %v80
  %1165 = vmatprep.subr.mxu0 %v77
  %1166 = vmatpush1.msra.mxu0 %v76
  %1167 = vmatprep.subr.mxu0 %v73
  %1168 = vmatpush1.msra.mxu0 %v72
  %1169 = vmatprep.subr.mxu0 %v69
  %1170 = vmatpush1.msra.mxu0 %v68
  %1171 = vmatprep.subr.mxu0 %v65
  %1172 = vmatpush1.msra.mxu0 %v64
  %1173 = vmatprep.subr.mxu0 %v61
  %1174 = vmatpush1.msra.mxu0 %v60
  %1175 = vmatprep.subr.mxu0 %v57
  %1176 = vmatpush1.msra.mxu0 %v56
  %1177 = vmatprep.subr.mxu0 %v53
  %1178 = vmatpush1.msra.mxu0 %v52
  %1179 = vmatprep.subr.mxu0 %v49
  %1180 = vmatpush1.msra.mxu0 %v48
  %1181 = vmatprep.subr.mxu0 %v45
  %1182 = vmatpush1.msra.mxu0 %v44
  %1183 = vmatprep.subr.mxu0 %v41
  %1184 = vmatpush1.msra.mxu0 %v40
  %1185 = vmatprep.subr.mxu0 %v37
  %1186 = vmatpush1.msra.mxu0 %v36
  %1187 = vmatprep.subr.mxu0 %v33
  %1188 = vmatpush1.msra.mxu0 %v32
  %1189 = vmatprep.subr.mxu0 %v29
  %1190 = vmatpush1.msra.mxu0 %v28
  %1191 = vmatprep.subr.mxu0 0.0
  %1192 = vmatpush2.msra.mxu0 0.0
  %1193 = vmatprep.subr.mxu0 0.0
  %1194 = vmatpush2.msra.mxu0 0.0
  %1195 = vmatprep.subr.mxu0 0.0
  %1196 = vmatpush2.msra.mxu0 0.0
  %1197 = vmatprep.subr.mxu0 0.0
  %1198 = vmatpush2.msra.mxu0 0.0
  %1199 = vmatprep.subr.mxu0 0.0
  %1200 = vmatpush2.msra.mxu0 0.0
  %1201 = vmatprep.subr.mxu0 0.0
  %1202 = vmatpush2.msra.mxu0 0.0
  %1203 = vmatprep.subr.mxu0 0.0
  %1204 = vmatpush2.msra.mxu0 0.0
  %1205 = vmatprep.subr.mxu0 0.0
  %1206 = vmatpush2.msra.mxu0 0.0
  %1207 = vmatprep.subr.mxu0 0.0
  %1208 = vmatpush2.msra.mxu0 0.0
  %1209 = vmatprep.subr.mxu0 0.0
  %1210 = vmatpush2.msra.mxu0 0.0
  %1211 = vmatprep.subr.mxu0 0.0
  %1212 = vmatpush2.msra.mxu0 0.0
  %1213 = vmatprep.subr.mxu0 0.0
  %1214 = vmatpush2.msra.mxu0 0.0
  %1215 = vmatprep.subr.mxu0 0.0
  %1216 = vmatpush2.msra.mxu0 0.0
  %1217 = vmatprep.subr.mxu0 0.0
  %1218 = vmatpush2.msra.mxu0 0.0
  %1219 = vmatprep.subr.mxu0 0.0
  %1220 = vmatpush2.msra.mxu0 0.0
  %1221 = vmatprep.subr.mxu0 0.0
  %1222 = vmatpush2.msra.mxu0 0.0
  %1223 = vmatprep.mubr.f32.mxu0 0.0
  %1224 = vmatmul.mubr.f32.gmra.mxu0 %v1151
  %v1225 = vpop.f32.mrf.mxu0
  %v1226 = vadd.f32 0.0, %v1225
  %v1227 = vpop.f32.mrf.mxu0
  %v1228 = vadd.f32 0.0, %v1227
  %1229 = vdwg.mxu0
  %1230 = vmatprep.subr.mxu0 %v91
  %1231 = vmatpush1.msra.mxu0 %v90
  %1232 = vmatprep.subr.mxu0 %v87
  %1233 = vmatpush1.msra.mxu0 %v86
  %1234 = vmatprep.subr.mxu0 %v83
  %1235 = vmatpush1.msra.mxu0 %v82
  %1236 = vmatprep.subr.mxu0 %v79
  %1237 = vmatpush1.msra.mxu0 %v78
  %1238 = vmatprep.subr.mxu0 %v75
  %1239 = vmatpush1.msra.mxu0 %v74
  %1240 = vmatprep.subr.mxu0 %v71
  %1241 = vmatpush1.msra.mxu0 %v70
  %1242 = vmatprep.subr.mxu0 %v67
  %1243 = vmatpush1.msra.mxu0 %v66
  %1244 = vmatprep.subr.mxu0 %v63
  %1245 = vmatpush1.msra.mxu0 %v62
  %1246 = vmatprep.subr.mxu0 %v59
  %1247 = vmatpush1.msra.mxu0 %v58
  %1248 = vmatprep.subr.mxu0 %v55
  %1249 = vmatpush1.msra.mxu0 %v54
  %1250 = vmatprep.subr.mxu0 %v51
  %1251 = vmatpush1.msra.mxu0 %v50
  %1252 = vmatprep.subr.mxu0 %v47
  %1253 = vmatpush1.msra.mxu0 %v46
  %1254 = vmatprep.subr.mxu0 %v43
  %1255 = vmatpush1.msra.mxu0 %v42
  %1256 = vmatprep.subr.mxu0 %v39
  %1257 = vmatpush1.msra.mxu0 %v38
  %1258 = vmatprep.subr.mxu0 %v35
  %1259 = vmatpush1.msra.mxu0 %v34
  %1260 = vmatprep.subr.mxu0 %v31
  %1261 = vmatpush1.msra.mxu0 %v30
  %1262 = vmatprep.subr.mxu0 0.0
  %1263 = vmatpush2.msra.mxu0 0.0
  %1264 = vmatprep.subr.mxu0 0.0
  %1265 = vmatpush2.msra.mxu0 0.0
  %1266 = vmatprep.subr.mxu0 0.0
  %1267 = vmatpush2.msra.mxu0 0.0
  %1268 = vmatprep.subr.mxu0 0.0
  %1269 = vmatpush2.msra.mxu0 0.0
  %1270 = vmatprep.subr.mxu0 0.0
  %1271 = vmatpush2.msra.mxu0 0.0
  %1272 = vmatprep.subr.mxu0 0.0
  %1273 = vmatpush2.msra.mxu0 0.0
  %1274 = vmatprep.subr.mxu0 0.0
  %1275 = vmatpush2.msra.mxu0 0.0
  %1276 = vmatprep.subr.mxu0 0.0
  %1277 = vmatpush2.msra.mxu0 0.0
  %1278 = vmatprep.subr.mxu0 0.0
  %1279 = vmatpush2.msra.mxu0 0.0
  %1280 = vmatprep.subr.mxu0 0.0
  %1281 = vmatpush2.msra.mxu0 0.0
  %1282 = vmatprep.subr.mxu0 0.0
  %1283 = vmatpush2.msra.mxu0 0.0
  %1284 = vmatprep.subr.mxu0 0.0
  %1285 = vmatpush2.msra.mxu0 0.0
  %1286 = vmatprep.subr.mxu0 0.0
  %1287 = vmatpush2.msra.mxu0 0.0
  %1288 = vmatprep.subr.mxu0 0.0
  %1289 = vmatpush2.msra.mxu0 0.0
  %1290 = vmatprep.subr.mxu0 0.0
  %1291 = vmatpush2.msra.mxu0 0.0
  %1292 = vmatprep.subr.mxu0 0.0
  %1293 = vmatpush2.msra.mxu0 0.0
  %1294 = vmatprep.mubr.f32.mxu0 0.0
  %1295 = vmatmul.mubr.f32.gmra.mxu0 %v1151
  %v1296 = vpop.f32.mrf.mxu0
  %v1297 = vadd.f32 0.0, %v1296
  %v1298 = vpop.f32.mrf.mxu0
  %v1299 = vadd.f32 0.0, %v1298
  %1300 = vdwg.mxu0
  %v1301 = vadd.f32 %v1155, %v1226
  %v1302 = vadd.f32 %v1156, %v1228
  %v1303 = vadd.f32 %v1157, %v1297
  %v1304 = vadd.f32 %v1158, %v1299
  %v1305 = vxor.u32 %v1301, 2147483648
  %v1306 = vmul.f32 %v1305, 1.442695
  %v1307 = vpow.pop %v1306
  %v1308 = vadd.f32 %v1307, 1.0
  %v1309 = vrcp.pop %v1308
  %v1310 = vmul.f32 1.0, %v1309
  %v1311 = vxor.u32 %v1302, 2147483648
  %v1312 = vmul.f32 %v1311, 1.442695
  %v1313 = vpow.pop %v1312
  %v1314 = vadd.f32 %v1313, 1.0
  %v1315 = vrcp.pop %v1314
  %v1316 = vmul.f32 1.0, %v1315
  %v1317 = vtanh.pop %v1303
  %v1318 = vxor.u32 %v1304, 2147483648
  %v1319 = vmul.f32 %v1318, 1.442695
  %v1320 = vpow.pop %v1319
  %v1321 = vadd.f32 %v1320, 1.0
  %v1322 = vrcp.pop %v1321
  %v1323 = vmul.f32 1.0, %v1322
  %v1324 = vmul.f32 %v1316, %v1149
  %v1325 = vmul.f32 %v1310, %v1317
  %v1326 = vadd.f32 %v1324, %v1325
  %v1327 = vtanh.pop %v1326
  %v1328 = vmul.f32 %v1323, %v1327
  %s1329 = scalar_lea.vmem %s4, 48
  %1330 = vst [vmem:[%s1329] sm:$0xff] %v1328
  %s1331 = scalar_lea.vmem %s0, 224
  %v1332 = vld [vmem:[%s1331] sm:$0xff]
  %v1333 = vld [vmem:[%s1331 + $0x8] sm:$0xff]
  %v1334 = vld [vmem:[%s1331 + $0x10] sm:$0xff]
  %v1335 = vld [vmem:[%s1331 + $0x18] sm:$0xff]
  %1336 = vmatprep.subr.mxu0 %v89
  %1337 = vmatpush1.msra.mxu0 %v88
  %1338 = vmatprep.subr.mxu0 %v85
  %1339 = vmatpush1.msra.mxu0 %v84
  %1340 = vmatprep.subr.mxu0 %v81
  %1341 = vmatpush1.msra.mxu0 %v80
  %1342 = vmatprep.subr.mxu0 %v77
  %1343 = vmatpush1.msra.mxu0 %v76
  %1344 = vmatprep.subr.mxu0 %v73
  %1345 = vmatpush1.msra.mxu0 %v72
  %1346 = vmatprep.subr.mxu0 %v69
  %1347 = vmatpush1.msra.mxu0 %v68
  %1348 = vmatprep.subr.mxu0 %v65
  %1349 = vmatpush1.msra.mxu0 %v64
  %1350 = vmatprep.subr.mxu0 %v61
  %1351 = vmatpush1.msra.mxu0 %v60
  %1352 = vmatprep.subr.mxu0 %v57
  %1353 = vmatpush1.msra.mxu0 %v56
  %1354 = vmatprep.subr.mxu0 %v53
  %1355 = vmatpush1.msra.mxu0 %v52
  %1356 = vmatprep.subr.mxu0 %v49
  %1357 = vmatpush1.msra.mxu0 %v48
  %1358 = vmatprep.subr.mxu0 %v45
  %1359 = vmatpush1.msra.mxu0 %v44
  %1360 = vmatprep.subr.mxu0 %v41
  %1361 = vmatpush1.msra.mxu0 %v40
  %1362 = vmatprep.subr.mxu0 %v37
  %1363 = vmatpush1.msra.mxu0 %v36
  %1364 = vmatprep.subr.mxu0 %v33
  %1365 = vmatpush1.msra.mxu0 %v32
  %1366 = vmatprep.subr.mxu0 %v29
  %1367 = vmatpush1.msra.mxu0 %v28
  %1368 = vmatprep.subr.mxu0 0.0
  %1369 = vmatpush2.msra.mxu0 0.0
  %1370 = vmatprep.subr.mxu0 0.0
  %1371 = vmatpush2.msra.mxu0 0.0
  %1372 = vmatprep.subr.mxu0 0.0
  %1373 = vmatpush2.msra.mxu0 0.0
  %1374 = vmatprep.subr.mxu0 0.0
  %1375 = vmatpush2.msra.mxu0 0.0
  %1376 = vmatprep.subr.mxu0 0.0
  %1377 = vmatpush2.msra.mxu0 0.0
  %1378 = vmatprep.subr.mxu0 0.0
  %1379 = vmatpush2.msra.mxu0 0.0
  %1380 = vmatprep.subr.mxu0 0.0
  %1381 = vmatpush2.msra.mxu0 0.0
  %1382 = vmatprep.subr.mxu0 0.0
  %1383 = vmatpush2.msra.mxu0 0.0
  %1384 = vmatprep.subr.mxu0 0.0
  %1385 = vmatpush2.msra.mxu0 0.0
  %1386 = vmatprep.subr.mxu0 0.0
  %1387 = vmatpush2.msra.mxu0 0.0
  %1388 = vmatprep.subr.mxu0 0.0
  %1389 = vmatpush2.msra.mxu0 0.0
  %1390 = vmatprep.subr.mxu0 0.0
  %1391 = vmatpush2.msra.mxu0 0.0
  %1392 = vmatprep.subr.mxu0 0.0
  %1393 = vmatpush2.msra.mxu0 0.0
  %1394 = vmatprep.subr.mxu0 0.0
  %1395 = vmatpush2.msra.mxu0 0.0
  %1396 = vmatprep.subr.mxu0 0.0
  %1397 = vmatpush2.msra.mxu0 0.0
  %1398 = vmatprep.subr.mxu0 0.0
  %1399 = vmatpush2.msra.mxu0 0.0
  %1400 = vmatprep.mubr.f32.mxu0 0.0
  %1401 = vmatmul.mubr.f32.gmra.mxu0 %v1328
  %v1402 = vpop.f32.mrf.mxu0
  %v1403 = vadd.f32 0.0, %v1402
  %v1404 = vpop.f32.mrf.mxu0
  %v1405 = vadd.f32 0.0, %v1404
  %1406 = vdwg.mxu0
  %1407 = vmatprep.subr.mxu0 %v91
  %1408 = vmatpush1.msra.mxu0 %v90
  %1409 = vmatprep.subr.mxu0 %v87
  %1410 = vmatpush1.msra.mxu0 %v86
  %1411 = vmatprep.subr.mxu0 %v83
  %1412 = vmatpush1.msra.mxu0 %v82
  %1413 = vmatprep.subr.mxu0 %v79
  %1414 = vmatpush1.msra.mxu0 %v78
  %1415 = vmatprep.subr.mxu0 %v75
  %1416 = vmatpush1.msra.mxu0 %v74
  %1417 = vmatprep.subr.mxu0 %v71
  %1418 = vmatpush1.msra.mxu0 %v70
  %1419 = vmatprep.subr.mxu0 %v67
  %1420 = vmatpush1.msra.mxu0 %v66
  %1421 = vmatprep.subr.mxu0 %v63
  %1422 = vmatpush1.msra.mxu0 %v62
  %1423 = vmatprep.subr.mxu0 %v59
  %1424 = vmatpush1.msra.mxu0 %v58
  %1425 = vmatprep.subr.mxu0 %v55
  %1426 = vmatpush1.msra.mxu0 %v54
  %1427 = vmatprep.subr.mxu0 %v51
  %1428 = vmatpush1.msra.mxu0 %v50
  %1429 = vmatprep.subr.mxu0 %v47
  %1430 = vmatpush1.msra.mxu0 %v46
  %1431 = vmatprep.subr.mxu0 %v43
  %1432 = vmatpush1.msra.mxu0 %v42
  %1433 = vmatprep.subr.mxu0 %v39
  %1434 = vmatpush1.msra.mxu0 %v38
  %1435 = vmatprep.subr.mxu0 %v35
  %1436 = vmatpush1.msra.mxu0 %v34
  %1437 = vmatprep.subr.mxu0 %v31
  %1438 = vmatpush1.msra.mxu0 %v30
  %1439 = vmatprep.subr.mxu0 0.0
  %1440 = vmatpush2.msra.mxu0 0.0
  %1441 = vmatprep.subr.mxu0 0.0
  %1442 = vmatpush2.msra.mxu0 0.0
  %1443 = vmatprep.subr.mxu0 0.0
  %1444 = vmatpush2.msra.mxu0 0.0
  %1445 = vmatprep.subr.mxu0 0.0
  %1446 = vmatpush2.msra.mxu0 0.0
  %1447 = vmatprep.subr.mxu0 0.0
  %1448 = vmatpush2.msra.mxu0 0.0
  %1449 = vmatprep.subr.mxu0 0.0
  %1450 = vmatpush2.msra.mxu0 0.0
  %1451 = vmatprep.subr.mxu0 0.0
  %1452 = vmatpush2.msra.mxu0 0.0
  %1453 = vmatprep.subr.mxu0 0.0
  %1454 = vmatpush2.msra.mxu0 0.0
  %1455 = vmatprep.subr.mxu0 0.0
  %1456 = vmatpush2.msra.mxu0 0.0
  %1457 = vmatprep.subr.mxu0 0.0
  %1458 = vmatpush2.msra.mxu0 0.0
  %1459 = vmatprep.subr.mxu0 0.0
  %1460 = vmatpush2.msra.mxu0 0.0
  %1461 = vmatprep.subr.mxu0 0.0
  %1462 = vmatpush2.msra.mxu0 0.0
  %1463 = vmatprep.subr.mxu0 0.0
  %1464 = vmatpush2.msra.mxu0 0.0
  %1465 = vmatprep.subr.mxu0 0.0
  %1466 = vmatpush2.msra.mxu0 0.0
  %1467 = vmatprep.subr.mxu0 0.0
  %1468 = vmatpush2.msra.mxu0 0.0
  %1469 = vmatprep.subr.mxu0 0.0
  %1470 = vmatpush2.msra.mxu0 0.0
  %1471 = vmatprep.mubr.f32.mxu0 0.0
  %1472 = vmatmul.mubr.f32.gmra.mxu0 %v1328
  %v1473 = vpop.f32.mrf.mxu0
  %v1474 = vadd.f32 0.0, %v1473
  %v1475 = vpop.f32.mrf.mxu0
  %v1476 = vadd.f32 0.0, %v1475
  %1477 = vdwg.mxu0
  %v1478 = vadd.f32 %v1332, %v1403
  %v1479 = vadd.f32 %v1333, %v1405
  %v1480 = vadd.f32 %v1334, %v1474
  %v1481 = vadd.f32 %v1335, %v1476
  %v1482 = vxor.u32 %v1478, 2147483648
  %v1483 = vmul.f32 %v1482, 1.442695
  %v1484 = vpow.pop %v1483
  %v1485 = vadd.f32 %v1484, 1.0
  %v1486 = vrcp.pop %v1485
  %v1487 = vmul.f32 1.0, %v1486
  %v1488 = vxor.u32 %v1479, 2147483648
  %v1489 = vmul.f32 %v1488, 1.442695
  %v1490 = vpow.pop %v1489
  %v1491 = vadd.f32 %v1490, 1.0
  %v1492 = vrcp.pop %v1491
  %v1493 = vmul.f32 1.0, %v1492
  %v1494 = vtanh.pop %v1480
  %v1495 = vxor.u32 %v1481, 2147483648
  %v1496 = vmul.f32 %v1495, 1.442695
  %v1497 = vpow.pop %v1496
  %v1498 = vadd.f32 %v1497, 1.0
  %v1499 = vrcp.pop %v1498
  %v1500 = vmul.f32 1.0, %v1499
  %v1501 = vmul.f32 %v1493, %v1326
  %v1502 = vmul.f32 %v1487, %v1494
  %v1503 = vadd.f32 %v1501, %v1502
  %v1504 = vtanh.pop %v1503
  %v1505 = vmul.f32 %v1500, %v1504
  %s1506 = scalar_lea.vmem %s4, 56
  %1507 = vst [vmem:[%s1506] sm:$0xff] %v1505
  %1508 = vst [vmem:[%s5] sm:$0xff] %v1505
  %1509 = vst [vmem:[%s6] sm:$0xff] %v1503
  // Predicated region
  $region22: #{lyrics_midi_lstm_forward.4} parent=0 // pred_check
    _
  $region23: #{lyrics_midi_lstm_forward.4} parent=0 // pred_check_branch
    %1511 = sbr.rel (0) target = $region25
  $region24: #{lyrics_midi_lstm_forward.4} parent=0 // pred_region
    _
  $region25: #{lyrics_midi_lstm_forward.4} parent=0 // pred_fallthru
    _
  // Predicated region
  $region26: #{lyrics_midi_lstm_forward.4} parent=0 // pred_check
    _
  $region27: #{lyrics_midi_lstm_forward.4} parent=0 // pred_check_branch
    %1513 = sbr.rel (0) target = $region29
  $region28: #{lyrics_midi_lstm_forward.4} parent=0 // pred_region
    _
  $region29: #{lyrics_midi_lstm_forward.4} parent=0 // pred_fallthru
    _
  // Predicated region
  $region30: #{lyrics_midi_lstm_forward.4} parent=0 // pred_check
    _
  $region31: #{lyrics_midi_lstm_forward.4} parent=0 // pred_check_branch
    %1515 = sbr.rel (0) target = $region33
  $region32: #{lyrics_midi_lstm_forward.4} parent=0 // pred_region
    _
  $region33: #{lyrics_midi_lstm_forward.4} parent=0 // pred_fallthru
    _
  // Predicated region
  $region34: #{lyrics_midi_lstm_forward.4} parent=0 // pred_check
    _
  $region35: #{lyrics_midi_lstm_forward.4} parent=0 // pred_check_branch
    %1517 = sbr.rel (0) target = $region37
  $region36: #{lyrics_midi_lstm_forward.4} parent=0 // pred_region
    _
  $region37: #{lyrics_midi_lstm_forward.4} parent=0 // pred_fallthru
    _
  // Predicated region
  $region38: #{lyrics_midi_lstm_forward.4} parent=0 // pred_check
    _
  $region39: #{lyrics_midi_lstm_forward.4} parent=0 // pred_check_branch
    %1519 = sbr.rel (0) target = $region41
  $region40: #{lyrics_midi_lstm_forward.4} parent=0 // pred_region
    _
  $region41: #{lyrics_midi_lstm_forward.4} parent=0 // pred_fallthru
    _
  // Predicated region
  $region42: #{lyrics_midi_lstm_forward.4} parent=0 // pred_check
    _
  $region43: #{lyrics_midi_lstm_forward.4} parent=0 // pred_check_branch
    %1521 = sbr.rel (0) target = $region45
  $region44: #{lyrics_midi_lstm_forward.4} parent=0 // pred_region
    _
  $region45: #{lyrics_midi_lstm_forward.4} parent=0 // pred_fallthru
    _

</llo_original>
